<compile_context>
chip_gen: v5e
topology: v5e:2x2
jax: 0.10.0
libtpu: 0.0.40
codegen_flags: <defaults>
</compile_context>

<pallas_src>
import jax
import jax.numpy as jnp
from jax.experimental import pallas as pl
from jax.experimental.pallas import tpu as pltpu

# ---------------------------------------------------------------------------
# Problem sizes.
# ---------------------------------------------------------------------------
B = 256        # batch
F = 64         # n_features
H = 32         # hidden width of encoder/decoder
L = 16         # n_latent (intrinsic)
L2 = 2 * L
FACTOR_DIMS = (8, 8)   # product-manifold factorization of the latent dim
EPS_VAR = 1e-8

OUT_W = 128                   # packed output slab width: F + 2L = 96, padded to 128 lanes
PAD_W = OUT_W - (F + L2)
W_STACK_ROWS = F + H + L + H  # rows of stacked weight buffer [w1; w_head; w2; w3] = 144
W_STACK_COLS = F              # lane width 64 (w1/w_head/w2 use cols 0:H, w3 uses 0:F)
B_ALL_W = F + H + L2 + H      # packed bias row: [b3 | b1 | b_head | b2] = 160 lanes

MATMUL_DTYPE = jnp.bfloat16   # native MXU operand dtype on v5e/v6e/v7x; f32 accumulate
IO_DTYPE = jnp.bfloat16       # activations + output slab in HBM (halves DMA bytes)

assert L2 == H, "weight stacking assumes the fused head (H, 2L) shares lane width H"


def _tensorcores_per_chip() -> int:
    """Best-effort detection: 2 TensorCores/chip on v7x, 1 on v5e/v6e."""
    try:
        kind = jax.devices()[0].device_kind.lower()
    except Exception:
        return 1
    return 2 if ("v7" in kind or "7x" in kind) else 1


_NUM_TC = _tensorcores_per_chip()
if B % _NUM_TC != 0:
    _NUM_TC = 1
B_TILE = B // _NUM_TC          # one tile per TensorCore -> grid of 1 (v5e/v6e) or 2 (v7x)
assert B % B_TILE == 0 and B_TILE % 16 == 0   # 16: bf16 sublane packing


def _mm(a, b):
    return jnp.dot(a.astype(MATMUL_DTYPE), b.astype(MATMUL_DTYPE),
                   preferred_element_type=jnp.float32)


def _vae_forward_kernel(x_ref, eps_ref, w_ref, b_all_ref, out_ref):
    """Fused encoder -> reparameterized sample -> decoder for one batch tile.

    out_ref [B_TILE, 128] lane-dense bf16 slab =
        [x_rec (F) | z_mean (L) | sig_diag (L) | pad].
    """
    x = x_ref[...]                              # bf16 (B_TILE, F): goes straight to MXU
    eps = eps_ref[...].astype(jnp.float32)      # f32 for VPU reparam math

    # Static row/col slices of the merged weight buffer (cheap 8-row-aligned views).
    w1 = w_ref[0:F, 0:H]                              # (F, H)
    w_head = w_ref[F:F + H, 0:H]                      # (H, 2L)
    w2 = w_ref[F + H:F + H + L, 0:H]                  # (L, H)
    w3 = w_ref[F + H + L:F + H + L + H, 0:F]          # (H, F)

    # Packed bias row: [b3 (F) | b1 (H) | b_head (2L) | b2 (H)]  (b3 first so no
    # slice straddles the 128-lane boundary). Biases stay f32 (post-matmul add).
    b3 = b_all_ref[:, 0:F]
    b1 = b_all_ref[:, F:F + H]
    b_head = b_all_ref[:, F + H:F + H + L2]
    b2 = b_all_ref[:, F + H + L2:F + H + L2 + H]

    # ---- encoder (fused mean/logvar head: one matmul, split with static slices)
    h = jnp.tanh(_mm(x, w1) + b1)
    head = _mm(h, w_head) + b_head                # (B_TILE, 2L) f32
    z_mean = head[:, 0:L]
    z_logvar = head[:, L:L2]

    # ---- sigmas = diag(exp(logvar) + 1e-8); kept as a vector (diag_embed in glue).
    sig_diag = jnp.exp(z_logvar) + EPS_VAR

    # ---- pm.sample: Gaussian reparameterization per (Euclidean) factor
    z = z_mean + jnp.sqrt(sig_diag) * eps

    # ---- decoder
    hd = jnp.tanh(_mm(z, w2) + b2)
    x_rec = _mm(hd, w3) + b3

    # ---- single lane-dense (128-wide) bf16 store
    pad = jnp.zeros((x_rec.shape[0], PAD_W), jnp.float32)
    out_ref[...] = jnp.concatenate([x_rec, z_mean, sig_diag, pad],
                                   axis=1).astype(out_ref.dtype)


def pack_params(params):
    """One-time packing of the 10 PyTorch-style params into 2 kernel operands."""
    (w1, b1, wm, bm, wv, bv, w2, b2, w3, b3) = params
    w_head = jnp.concatenate([wm, wv], axis=1)                 # (H, 2L)
    b_head = jnp.concatenate([bm, bv], axis=1)                 # (1, 2L)
    top = jnp.concatenate([w1, w_head, w2], axis=0)            # (F+H+L, H)
    top = jnp.pad(top, ((0, 0), (0, W_STACK_COLS - H)))        # lane-pad 32 -> 64
    w_stack = jnp.concatenate([top, w3], axis=0)               # (F+H+L+H, F) = (144, 64)
    w_stack = w_stack.astype(MATMUL_DTYPE)
    b_all = jnp.concatenate([b3, b1, b_head, b2], axis=1)      # (1, 160) f32
    return w_stack, b_all


def product_space_vae_forward(x, eps, packed_params):
    """Calls the fused Pallas kernel and reassembles the PyTorch return tuple:
    (x_reconstructed, z_means, sigmas) where sigmas is a list of [B, d_k, d_k]."""
    w_stack, b_all = packed_params
    x_b = x.astype(IO_DTYPE)
    eps_b = eps.astype(IO_DTYPE)

    cost = pl.CostEstimate(
        flops=2 * B * (F * H + H * L2 + L * H + H * F),
        transcendentals=B * (H + L + L + H),
        bytes_accessed=(2 * (B * F + B * L + B * OUT_W)          # bf16 activations + slab
                        + 2 * W_STACK_ROWS * W_STACK_COLS        # bf16 weights
                        + 4 * B_ALL_W),                          # f32 biases
    )

    out = pl.pallas_call(
        _vae_forward_kernel,
        out_shape=jax.ShapeDtypeStruct((B, OUT_W), IO_DTYPE),
        grid_spec=pltpu.PrefetchScalarGridSpec(
            num_scalar_prefetch=0,
            grid=(B // B_TILE,),                                  # 1 (v5e/v6e) or 2 (v7x)
            in_specs=[
                pl.BlockSpec((B_TILE, F), lambda i: (i, 0)),      # x tile (bf16)
                pl.BlockSpec((B_TILE, L), lambda i: (i, 0)),      # eps tile (bf16)
                pl.BlockSpec((W_STACK_ROWS, W_STACK_COLS), lambda i: (0, 0)),  # weights (resident)
                pl.BlockSpec((1, B_ALL_W), lambda i: (0, 0)),     # packed biases (resident)
            ],
            out_specs=pl.BlockSpec((B_TILE, OUT_W), lambda i: (i, 0)),
        ),
        compiler_params=pltpu.CompilerParams(
            dimension_semantics=("parallel",),   # one tile per TensorCore on v7x
        ),
        cost_estimate=cost,
    )(x_b, eps_b, w_stack, b_all)

    # Unpack the lane-dense slab; hand results back in f32 (module semantics).
    out_f = out.astype(jnp.float32)
    x_rec = out_f[:, 0:F]
    z_mean = out_f[:, F:F + L]
    sig_diag = out_f[:, F + L:F + L2]

    # Glue: pm.factorize + torch.diag_embed equivalent (pure layout work).
    sigmas = []
    off = 0
    for d in FACTOR_DIMS:
        factor = sig_diag[:, off:off + d]                                    # [B, d]
        sigmas.append(factor[:, :, None] * jnp.eye(d, dtype=factor.dtype))   # [B, d, d]
        off += d
    return x_rec, z_mean, sigmas


def _reference_forward(x, eps, params):
    """Pure-JAX reference mirroring the kernel's mixed precision
    (bf16 MXU operands / bf16 activations in, f32 accumulate + VPU math)."""
    (w1, b1, wm, bm, wv, bv, w2, b2, w3, b3) = params

    def mm(a, b):
        return jnp.dot(a.astype(MATMUL_DTYPE), b.astype(MATMUL_DTYPE),
                       preferred_element_type=jnp.float32)

    xb = x.astype(IO_DTYPE)
    epsf = eps.astype(IO_DTYPE).astype(jnp.float32)
    w_head = jnp.concatenate([wm, wv], axis=1)
    b_head = jnp.concatenate([bm, bv], axis=1)

    h = jnp.tanh(mm(xb, w1) + b1)
    head = mm(h, w_head) + b_head
    z_mean = head[:, 0:L]
    z_logvar = head[:, L:L2]
    sig_diag = jnp.exp(z_logvar) + EPS_VAR
    z = z_mean + jnp.sqrt(sig_diag) * epsf
    hd = jnp.tanh(mm(z, w2) + b2)
    x_rec = mm(hd, w3) + b3

    sigmas = []
    off = 0
    for d in FACTOR_DIMS:
        factor = sig_diag[:, off:off + d]
        sigmas.append(factor[:, :, None] * jnp.eye(d, dtype=factor.dtype))
        off += d
    return x_rec, z_mean, sigmas


def _init_params(key):
    ks = jax.random.split(key, 10)
    scale = 0.1
    w1 = scale * jax.random.normal(ks[0], (F, H), jnp.float32)
    b1 = jnp.zeros((1, H), jnp.float32)
    wm = scale * jax.random.normal(ks[1], (H, L), jnp.float32)
    bm = jnp.zeros((1, L), jnp.float32)
    wv = scale * jax.random.normal(ks[2], (H, L), jnp.float32)
    bv = jnp.zeros((1, L), jnp.float32)
    w2 = scale * jax.random.normal(ks[3], (L, H), jnp.float32)
    b2 = jnp.zeros((1, H), jnp.float32)
    w3 = scale * jax.random.normal(ks[4], (H, F), jnp.float32)
    b3 = jnp.zeros((1, F), jnp.float32)
    return (w1, b1, wm, bm, wv, bv, w2, b2, w3, b3)


if __name__ == "__main__":
    key = jax.random.PRNGKey(0)
    k_x, k_eps, k_params = jax.random.split(key, 3)

    x = jax.random.normal(k_x, (B, F), jnp.float32)
    # Reparameterization noise is an explicit input (TPU kernel stays pure).
    eps = jax.random.normal(k_eps, (B, L), jnp.float32)
    params = _init_params(k_params)
    packed = pack_params(params)

    x_rec, z_mean, sigmas = product_space_vae_forward(x, eps, packed)
    jax.block_until_ready((x_rec, z_mean, sigmas))

    # Validate against a pure-JAX reference with matching mixed precision
    # (also validates head fusion, weight/bias packing, and slab unpacking).
    # Tolerance covers the bf16 rounding of the packed output slab.
    x_rec_r, z_mean_r, sigmas_r = _reference_forward(x, eps, params)
    assert x_rec.shape == (B, F) and z_mean.shape == (B, L)
    assert len(sigmas) == len(FACTOR_DIMS)
    assert all(s.shape == (B, d, d) for s, d in zip(sigmas, FACTOR_DIMS))
    assert jnp.allclose(x_rec, x_rec_r, atol=3e-2)
    assert jnp.allclose(z_mean, z_mean_r, atol=3e-2)
    for s, sr in zip(sigmas, sigmas_r):
        assert jnp.allclose(s, sr, atol=3e-2)

    print("KERNEL_OK")
</pallas_src>

<mosaic_0001>
module attributes {stable_mosaic.version = 11 : i64} {
  func.func @_vae_forward_kernel(%arg0: i32, %arg1: memref<256x64xbf16, #tpu.memory_space<vmem>>, %arg2: memref<256x16xbf16, #tpu.memory_space<vmem>>, %arg3: memref<144x64xbf16, #tpu.memory_space<vmem>>, %arg4: memref<1x160xf32, #tpu.memory_space<vmem>>, %arg5: memref<256x128xbf16, #tpu.memory_space<vmem>>) attributes {dimension_semantics = [#tpu.dimension_semantics<parallel>], iteration_bounds = array<i64: 1>, scalar_prefetch = 0 : i64, scratch_operands = 0 : i64, tpu.core_type = #tpu.core_type<tc>, window_params = [{transform_indices = @transform_0, window_bounds = array<i64: 256, 64>}, {transform_indices = @transform_1, window_bounds = array<i64: 256, 16>}, {pipeline_mode = #tpu.pipeline_mode<synchronous>, transform_indices = @transform_2, window_bounds = array<i64: 144, 64>}, {pipeline_mode = #tpu.pipeline_mode<synchronous>, transform_indices = @transform_3, window_bounds = array<i64: 1, 160>}, {transform_indices = @transform_4, window_bounds = array<i64: 256, 128>}]} {
    %c0 = arith.constant 0 : index
    %c0_0 = arith.constant 0 : index
    %0 = vector.load %arg1[%c0, %c0_0] : memref<256x64xbf16, #tpu.memory_space<vmem>>, vector<256x64xbf16>
    %c0_1 = arith.constant 0 : index
    %c0_2 = arith.constant 0 : index
    %1 = vector.load %arg2[%c0_1, %c0_2] : memref<256x16xbf16, #tpu.memory_space<vmem>>, vector<256x16xbf16>
    %2 = arith.extf %1 : vector<256x16xbf16> to vector<256x16xf32>
    %c0_3 = arith.constant 0 : index
    %c0_4 = arith.constant 0 : index
    %3 = vector.load %arg3[%c0_3, %c0_4] : memref<144x64xbf16, #tpu.memory_space<vmem>>, vector<64x32xbf16>
    %c64 = arith.constant 64 : index
    %c0_5 = arith.constant 0 : index
    %4 = vector.load %arg3[%c64, %c0_5] : memref<144x64xbf16, #tpu.memory_space<vmem>>, vector<32x32xbf16>
    %c96 = arith.constant 96 : index
    %c0_6 = arith.constant 0 : index
    %5 = vector.load %arg3[%c96, %c0_6] : memref<144x64xbf16, #tpu.memory_space<vmem>>, vector<16x32xbf16>
    %c112 = arith.constant 112 : index
    %c0_7 = arith.constant 0 : index
    %6 = vector.load %arg3[%c112, %c0_7] : memref<144x64xbf16, #tpu.memory_space<vmem>>, vector<32x64xbf16>
    %c0_8 = arith.constant 0 : index
    %c0_9 = arith.constant 0 : index
    %7 = vector.load %arg4[%c0_8, %c0_9] : memref<1x160xf32, #tpu.memory_space<vmem>>, vector<1x64xf32>
    %c0_10 = arith.constant 0 : index
    %c64_11 = arith.constant 64 : index
    %8 = vector.load %arg4[%c0_10, %c64_11] : memref<1x160xf32, #tpu.memory_space<vmem>>, vector<1x32xf32>
    %c0_12 = arith.constant 0 : index
    %c96_13 = arith.constant 96 : index
    %9 = vector.load %arg4[%c0_12, %c96_13] : memref<1x160xf32, #tpu.memory_space<vmem>>, vector<1x32xf32>
    %c0_14 = arith.constant 0 : index
    %c128 = arith.constant 128 : index
    %10 = vector.load %arg4[%c0_14, %c128] : memref<1x160xf32, #tpu.memory_space<vmem>>, vector<1x32xf32>
    %cst = arith.constant dense<0.000000e+00> : vector<256x32xf32>
    %11 = tpu.matmul %0, %3, %cst {dimension_numbers = #tpu.dot_dimension_numbers<[1], [0], [0], [1], [0, 0, 1, 1], [], []>} : vector<256x64xbf16>, vector<64x32xbf16>, vector<256x32xf32> -> vector<256x32xf32>
    %12 = vector.broadcast %8 : vector<1x32xf32> to vector<256x32xf32>
    %13 = arith.addf %11, %12 : vector<256x32xf32>
    %14 = math.tanh %13 : vector<256x32xf32>
    %15 = arith.truncf %14 : vector<256x32xf32> to vector<256x32xbf16>
    %cst_15 = arith.constant dense<0.000000e+00> : vector<256x32xf32>
    %16 = tpu.matmul %15, %4, %cst_15 {dimension_numbers = #tpu.dot_dimension_numbers<[1], [0], [0], [1], [0, 0, 1, 1], [], []>} : vector<256x32xbf16>, vector<32x32xbf16>, vector<256x32xf32> -> vector<256x32xf32>
    %17 = vector.broadcast %9 : vector<1x32xf32> to vector<256x32xf32>
    %18 = arith.addf %16, %17 : vector<256x32xf32>
    %19 = vector.extract_strided_slice %18 {offsets = [0, 0], sizes = [256, 16], strides = [1, 1]} : vector<256x32xf32> to vector<256x16xf32>
    %20 = vector.extract_strided_slice %18 {offsets = [0, 16], sizes = [256, 16], strides = [1, 1]} : vector<256x32xf32> to vector<256x16xf32>
    %21 = math.exp %20 : vector<256x16xf32>
    %cst_16 = arith.constant 9.99999993E-9 : f32
    %22 = vector.broadcast %cst_16 : f32 to vector<256x16xf32>
    %23 = arith.addf %21, %22 : vector<256x16xf32>
    %24 = math.sqrt %23 : vector<256x16xf32>
    %25 = arith.mulf %24, %2 : vector<256x16xf32>
    %26 = arith.addf %19, %25 : vector<256x16xf32>
    %27 = arith.truncf %26 : vector<256x16xf32> to vector<256x16xbf16>
    %cst_17 = arith.constant dense<0.000000e+00> : vector<256x32xf32>
    %28 = tpu.matmul %27, %5, %cst_17 {dimension_numbers = #tpu.dot_dimension_numbers<[1], [0], [0], [1], [0, 0, 1, 1], [], []>} : vector<256x16xbf16>, vector<16x32xbf16>, vector<256x32xf32> -> vector<256x32xf32>
    %29 = vector.broadcast %10 : vector<1x32xf32> to vector<256x32xf32>
    %30 = arith.addf %28, %29 : vector<256x32xf32>
    %31 = math.tanh %30 : vector<256x32xf32>
    %32 = arith.truncf %31 : vector<256x32xf32> to vector<256x32xbf16>
    %cst_18 = arith.constant dense<0.000000e+00> : vector<256x64xf32>
    %33 = tpu.matmul %32, %6, %cst_18 {dimension_numbers = #tpu.dot_dimension_numbers<[1], [0], [0], [1], [0, 0, 1, 1], [], []>} : vector<256x32xbf16>, vector<32x64xbf16>, vector<256x64xf32> -> vector<256x64xf32>
    %34 = vector.broadcast %7 : vector<1x64xf32> to vector<256x64xf32>
    %35 = arith.addf %33, %34 : vector<256x64xf32>
    %cst_19 = arith.constant 0.000000e+00 : f32
    %36 = vector.broadcast %cst_19 : f32 to vector<256x32xf32>
    %37 = tpu.concatenate %35, %19, %23, %36 in 1 : vector<256x64xf32>, vector<256x16xf32>, vector<256x16xf32>, vector<256x32xf32> -> vector<256x128xf32>
    %38 = arith.truncf %37 : vector<256x128xf32> to vector<256x128xbf16>
    %c0_20 = arith.constant 0 : index
    %c0_21 = arith.constant 0 : index
    %39 = vector.load %arg5[%c0_20, %c0_21] : memref<256x128xbf16, #tpu.memory_space<vmem>>, vector<256x128xbf16>
    tpu.vector_store %arg5[%c0_20, %c0_21], %38 {strides = array<i32>} : memref<256x128xbf16, #tpu.memory_space<vmem>>, vector<256x128xbf16>,
    return
  }
  func.func @transform_0(%arg0: i32) -> (i32, i32) {
    %c0_i32 = arith.constant 0 : i32
    %c0_i32_0 = arith.constant 0 : i32
    return %arg0, %c0_i32 : i32, i32
  }
  func.func @transform_1(%arg0: i32) -> (i32, i32) {
    %c0_i32 = arith.constant 0 : i32
    %c0_i32_0 = arith.constant 0 : i32
    return %arg0, %c0_i32 : i32, i32
  }
  func.func @transform_2(%arg0: i32) -> (i32, i32) {
    %c0_i32 = arith.constant 0 : i32
    %c0_i32_0 = arith.constant 0 : i32
    %c0_i32_1 = arith.constant 0 : i32
    return %c0_i32, %c0_i32_0 : i32, i32
  }
  func.func @transform_3(%arg0: i32) -> (i32, i32) {
    %c0_i32 = arith.constant 0 : i32
    %c0_i32_0 = arith.constant 0 : i32
    %c0_i32_1 = arith.constant 0 : i32
    return %c0_i32, %c0_i32_0 : i32, i32
  }
  func.func @transform_4(%arg0: i32) -> (i32, i32) {
    %c0_i32 = arith.constant 0 : i32
    %c0_i32_0 = arith.constant 0 : i32
    return %arg0, %c0_i32 : i32, i32
  }
}

</mosaic_0001>

<llo_original>
// kernel: tpu_custom_call.1
$region0: #{tpu_custom_call.1}
  #allocation0 [shape = 'u32[]', space=smem, size = 0x4, offset = 0x4, fixed_abs, tag = 'smem constant byte address 0x4 - core index']
  #allocation1 [shape = 'u32[72,128]{1,0:T(1,128)}', space=vmem, size = 0x9000, scoped, tag = 'internal scratch']
  %s0 = inlined_call_operand.vmem [shape: bf16[256,64], index: 0, kind: input, shape index: {}]
  %s1 = inlined_call_operand.vmem [shape: bf16[256,16], index: 1, kind: input, shape index: {}]
  %s2 = inlined_call_operand.vmem [shape: bf16[144,64], index: 2, kind: input, shape index: {}]
  %s3 = inlined_call_operand.vmem [shape: f32[1,160], index: 3, kind: input, shape index: {}]
  %s4 = inlined_call_operand.hbm [shape: bf16[256,128], index: 4, kind: output, shape index: {}]
  %s5 = sld [smem:[#allocation0]]
  $region26: #{tpu_custom_call.1} parent=0
    _
  %s7 = ssub.s32 1, %s5
  %s8 = scalar_select 0, %s7, %s5
  $region1: #{tpu_custom_call.1} parent=0
    #allocation2 [shape = 'u8[65536]{0}', space=vmem, size = 0x10000, scoped, tag = 'output window, operand 0, single buffered']
    #allocation3 [shape = 's32[1]{0}', space=sflag, size = 0x4, scoped, tag = 'scoped memory for tpu_custom_call.1']
    %9 = vsyncpa [#allocation3], 0
    // Predicated region
    $region2: #{tpu_custom_call.1} parent=1 // pred_check
      _
    $region3: #{tpu_custom_call.1} parent=1 // pred_check_branch
      %11 = sbr.rel (0) target = $region5
    $region4: #{tpu_custom_call.1} parent=1 // pred_region
      _
    $region5: #{tpu_custom_call.1} parent=1 // pred_fallthru
      _
    // Predicated region
    $region6: #{tpu_custom_call.1} parent=1 // pred_check
      _
    $region7: #{tpu_custom_call.1} parent=1 // pred_check_branch
      %13 = sbr.rel (0) target = $region9
    $region8: #{tpu_custom_call.1} parent=1 // pred_region
      _
    $region9: #{tpu_custom_call.1} parent=1 // pred_fallthru
      _
    // Predicated region
    $region10: #{tpu_custom_call.1} parent=1 // pred_check
      _
    $region11: #{tpu_custom_call.1} parent=1 // pred_check_branch
      %15 = sbr.rel (0) target = $region13
    $region12: #{tpu_custom_call.1} parent=1 // pred_region
      _
    $region13: #{tpu_custom_call.1} parent=1 // pred_fallthru
      _
    // Predicated region
    $region14: #{tpu_custom_call.1} parent=1 // pred_check
      _
    $region15: #{tpu_custom_call.1} parent=1 // pred_check_branch
      %17 = sbr.rel (0) target = $region17
    $region16: #{tpu_custom_call.1} parent=1 // pred_region
      _
    $region17: #{tpu_custom_call.1} parent=1 // pred_fallthru
      _
    %v19 = vld [vmem:[%s0] sm:$0xf]
    %v20 = vld [vmem:[%s0 + $0x4] sm:$0xf]
    %v21 = vld [vmem:[%s0 + $0x8] sm:$0xf]
    %v22 = vld [vmem:[%s0 + $0xc] sm:$0xf]
    %v23 = vld [vmem:[%s0 + $0x10] sm:$0xf]
    %v24 = vld [vmem:[%s0 + $0x14] sm:$0xf]
    %v25 = vld [vmem:[%s0 + $0x18] sm:$0xf]
    %v26 = vld [vmem:[%s0 + $0x1c] sm:$0xf]
    %v27 = vld [vmem:[%s0 + $0x20] sm:$0xf]
    %v28 = vld [vmem:[%s0 + $0x24] sm:$0xf]
    %v29 = vld [vmem:[%s0 + $0x28] sm:$0xf]
    %v30 = vld [vmem:[%s0 + $0x2c] sm:$0xf]
    %v31 = vld [vmem:[%s0 + $0x30] sm:$0xf]
    %v32 = vld [vmem:[%s0 + $0x34] sm:$0xf]
    %v33 = vld [vmem:[%s0 + $0x38] sm:$0xf]
    %v34 = vld [vmem:[%s0 + $0x3c] sm:$0xf]
    %v35 = vld [vmem:[%s0 + $0x40] sm:$0xf]
    %v36 = vld [vmem:[%s0 + $0x44] sm:$0xf]
    %v37 = vld [vmem:[%s0 + $0x48] sm:$0xf]
    %v38 = vld [vmem:[%s0 + $0x4c] sm:$0xf]
    %v39 = vld [vmem:[%s0 + $0x50] sm:$0xf]
    %v40 = vld [vmem:[%s0 + $0x54] sm:$0xf]
    %v41 = vld [vmem:[%s0 + $0x58] sm:$0xf]
    %v42 = vld [vmem:[%s0 + $0x5c] sm:$0xf]
    %v43 = vld [vmem:[%s0 + $0x60] sm:$0xf]
    %v44 = vld [vmem:[%s0 + $0x64] sm:$0xf]
    %v45 = vld [vmem:[%s0 + $0x68] sm:$0xf]
    %v46 = vld [vmem:[%s0 + $0x6c] sm:$0xf]
    %v47 = vld [vmem:[%s0 + $0x70] sm:$0xf]
    %v48 = vld [vmem:[%s0 + $0x74] sm:$0xf]
    %v49 = vld [vmem:[%s0 + $0x78] sm:$0xf]
    %v50 = vld [vmem:[%s0 + $0x7c] sm:$0xf]
    %v51 = vld [vmem:[%s1] sm:$0xf]
    %v52 = vld [vmem:[%s1 + $0x4] sm:$0xf]
    %v53 = vld [vmem:[%s1 + $0x8] sm:$0xf]
    %v54 = vld [vmem:[%s1 + $0xc] sm:$0xf]
    %v55 = vld [vmem:[%s1 + $0x10] sm:$0xf]
    %v56 = vld [vmem:[%s1 + $0x14] sm:$0xf]
    %v57 = vld [vmem:[%s1 + $0x18] sm:$0xf]
    %v58 = vld [vmem:[%s1 + $0x1c] sm:$0xf]
    %v59 = vld [vmem:[%s1 + $0x20] sm:$0xf]
    %v60 = vld [vmem:[%s1 + $0x24] sm:$0xf]
    %v61 = vld [vmem:[%s1 + $0x28] sm:$0xf]
    %v62 = vld [vmem:[%s1 + $0x2c] sm:$0xf]
    %v63 = vld [vmem:[%s1 + $0x30] sm:$0xf]
    %v64 = vld [vmem:[%s1 + $0x34] sm:$0xf]
    %v65 = vld [vmem:[%s1 + $0x38] sm:$0xf]
    %v66 = vld [vmem:[%s1 + $0x3c] sm:$0xf]
    %v67 = vld [vmem:[%s1 + $0x40] sm:$0xf]
    %v68 = vld [vmem:[%s1 + $0x44] sm:$0xf]
    %v69 = vld [vmem:[%s1 + $0x48] sm:$0xf]
    %v70 = vld [vmem:[%s1 + $0x4c] sm:$0xf]
    %v71 = vld [vmem:[%s1 + $0x50] sm:$0xf]
    %v72 = vld [vmem:[%s1 + $0x54] sm:$0xf]
    %v73 = vld [vmem:[%s1 + $0x58] sm:$0xf]
    %v74 = vld [vmem:[%s1 + $0x5c] sm:$0xf]
    %v75 = vld [vmem:[%s1 + $0x60] sm:$0xf]
    %v76 = vld [vmem:[%s1 + $0x64] sm:$0xf]
    %v77 = vld [vmem:[%s1 + $0x68] sm:$0xf]
    %v78 = vld [vmem:[%s1 + $0x6c] sm:$0xf]
    %v79 = vld [vmem:[%s1 + $0x70] sm:$0xf]
    %v80 = vld [vmem:[%s1 + $0x74] sm:$0xf]
    %v81 = vld [vmem:[%s1 + $0x78] sm:$0xf]
    %v82 = vld [vmem:[%s1 + $0x7c] sm:$0xf]
    %v83 = vunpack.c.l.bf16 %v51
    %v84 = vunpack.c.l.bf16 %v52
    %v85 = vunpack.c.l.bf16 %v53
    %v86 = vunpack.c.l.bf16 %v54
    %v87 = vunpack.c.l.bf16 %v55
    %v88 = vunpack.c.l.bf16 %v56
    %v89 = vunpack.c.l.bf16 %v57
    %v90 = vunpack.c.l.bf16 %v58
    %v91 = vunpack.c.l.bf16 %v59
    %v92 = vunpack.c.l.bf16 %v60
    %v93 = vunpack.c.l.bf16 %v61
    %v94 = vunpack.c.l.bf16 %v62
    %v95 = vunpack.c.l.bf16 %v63
    %v96 = vunpack.c.l.bf16 %v64
    %v97 = vunpack.c.l.bf16 %v65
    %v98 = vunpack.c.l.bf16 %v66
    %v99 = vunpack.c.l.bf16 %v67
    %v100 = vunpack.c.l.bf16 %v68
    %v101 = vunpack.c.l.bf16 %v69
    %v102 = vunpack.c.l.bf16 %v70
    %v103 = vunpack.c.l.bf16 %v71
    %v104 = vunpack.c.l.bf16 %v72
    %v105 = vunpack.c.l.bf16 %v73
    %v106 = vunpack.c.l.bf16 %v74
    %v107 = vunpack.c.l.bf16 %v75
    %v108 = vunpack.c.l.bf16 %v76
    %v109 = vunpack.c.l.bf16 %v77
    %v110 = vunpack.c.l.bf16 %v78
    %v111 = vunpack.c.l.bf16 %v79
    %v112 = vunpack.c.l.bf16 %v80
    %v113 = vunpack.c.l.bf16 %v81
    %v114 = vunpack.c.l.bf16 %v82
    %v115 = vld [vmem:[%s2] sm:$0xf]
    %v116 = vld [vmem:[%s2 + $0x4] sm:$0xf]
    %v117 = vld [vmem:[%s2 + $0x8] sm:$0xf]
    %v118 = vld [vmem:[%s2 + $0xc] sm:$0xf]
    %v119 = vld [vmem:[%s2 + $0x10] sm:$0xf]
    %v120 = vld [vmem:[%s2 + $0x14] sm:$0xf]
    %v121 = vld [vmem:[%s2 + $0x18] sm:$0xf]
    %v122 = vld [vmem:[%s2 + $0x1c] sm:$0xf]
    %v123 = vld [vmem:[%s2 + $0x20] sm:$0xf]
    %v124 = vld [vmem:[%s2 + $0x24] sm:$0xf]
    %v125 = vld [vmem:[%s2 + $0x28] sm:$0xf]
    %v126 = vld [vmem:[%s2 + $0x2c] sm:$0xf]
    %v127 = vld [vmem:[%s2 + $0x30] sm:$0xf]
    %v128 = vld [vmem:[%s2 + $0x34] sm:$0xf]
    %v129 = vld [vmem:[%s2 + $0x38] sm:$0xf]
    %v130 = vld [vmem:[%s2 + $0x3c] sm:$0xf]
    %v131 = vld [vmem:[%s2 + $0x40] sm:$0xf]
    %v132 = vld [vmem:[%s2 + $0x44] sm:$0xf]
    %v133 = vld [vmem:[%s3] sm:$0x1]
    %v134 = vld [vmem:[%s3 + $0x1] sm:$0x1]
    %v136 = vperm.slane %v133, 0
    %v169 = vunpack.c.l.b16 %v19
    %v170 = vunpack.c.l.b16 %v20
    %v171 = vunpack.c.l.b16 %v21
    %v172 = vunpack.c.l.b16 %v22
    %v173 = vunpack.c.l.b16 %v23
    %v174 = vunpack.c.l.b16 %v24
    %v175 = vunpack.c.l.b16 %v25
    %v176 = vunpack.c.l.b16 %v26
    %v177 = vunpack.c.l.b16 %v27
    %v178 = vunpack.c.l.b16 %v28
    %v179 = vunpack.c.l.b16 %v29
    %v180 = vunpack.c.l.b16 %v30
    %v181 = vunpack.c.l.b16 %v31
    %v182 = vunpack.c.l.b16 %v32
    %v183 = vunpack.c.l.b16 %v33
    %v184 = vunpack.c.l.b16 %v34
    %v185 = vunpack.c.l.b16 %v35
    %v186 = vunpack.c.l.b16 %v36
    %v187 = vunpack.c.l.b16 %v37
    %v188 = vunpack.c.l.b16 %v38
    %v189 = vunpack.c.l.b16 %v39
    %v190 = vunpack.c.l.b16 %v40
    %v191 = vunpack.c.l.b16 %v41
    %v192 = vunpack.c.l.b16 %v42
    %v193 = vunpack.c.l.b16 %v43
    %v194 = vunpack.c.l.b16 %v44
    %v195 = vunpack.c.l.b16 %v45
    %v196 = vunpack.c.l.b16 %v46
    %v197 = vunpack.c.l.b16 %v47
    %v198 = vunpack.c.l.b16 %v48
    %v199 = vunpack.c.l.b16 %v49
    %v200 = vunpack.c.l.b16 %v50
    %v201 = vpack.c.b16 %v170, %v169
    %v202 = vpack.c.b16 %v172, %v171
    %v203 = vpack.c.b16 %v174, %v173
    %v204 = vpack.c.b16 %v176, %v175
    %v205 = vpack.c.b16 %v178, %v177
    %v206 = vpack.c.b16 %v180, %v179
    %v207 = vpack.c.b16 %v182, %v181
    %v208 = vpack.c.b16 %v184, %v183
    %v209 = vpack.c.b16 %v186, %v185
    %v210 = vpack.c.b16 %v188, %v187
    %v211 = vpack.c.b16 %v190, %v189
    %v212 = vpack.c.b16 %v192, %v191
    %v213 = vpack.c.b16 %v194, %v193
    %v214 = vpack.c.b16 %v196, %v195
    %v215 = vpack.c.b16 %v198, %v197
    %v216 = vpack.c.b16 %v200, %v199
    %v225 = vunpack.c.l.b16 %v115
    %v226 = vunpack.c.l.b16 %v116
    %v227 = vunpack.c.l.b16 %v117
    %v228 = vunpack.c.l.b16 %v118
    %v229 = vunpack.c.l.b16 %v119
    %v230 = vunpack.c.l.b16 %v120
    %v231 = vunpack.c.l.b16 %v121
    %v232 = vunpack.c.l.b16 %v122
    %v233 = vpack.c.b16 %v226, %v225
    %v234 = vpack.c.b16 %v228, %v227
    %v235 = vpack.c.b16 %v230, %v229
    %v236 = vpack.c.b16 %v232, %v231
    %241 = vrot.lane.b32.xlu0 %v136, 64
    %v242 = vpop.permute.xlu0 %241
    %vm244 = vcmask 523264
    %v246 = vsel %vm244, %v201, 0
    %v249 = vsel %vm244, %v202, 0
    %v252 = vsel %vm244, %v203, 0
    %v255 = vsel %vm244, %v204, 0
    %v258 = vsel %vm244, %v205, 0
    %v261 = vsel %vm244, %v206, 0
    %v264 = vsel %vm244, %v207, 0
    %v267 = vsel %vm244, %v208, 0
    %v270 = vsel %vm244, %v209, 0
    %v273 = vsel %vm244, %v210, 0
    %v276 = vsel %vm244, %v211, 0
    %v279 = vsel %vm244, %v212, 0
    %v282 = vsel %vm244, %v213, 0
    %v285 = vsel %vm244, %v214, 0
    %v288 = vsel %vm244, %v215, 0
    %v291 = vsel %vm244, %v216, 0
    %293 = vmatpush.bf16.msra.mxu0 0
    %294 = vmatpush.bf16.msra.mxu0 0
    %295 = vmatpush.bf16.msra.mxu0 0
    %296 = vmatpush.bf16.msra.mxu0 0
    %297 = vmatpush.bf16.msra.mxu0 %v236
    %298 = vmatpush.bf16.msra.mxu0 %v235
    %299 = vmatpush.bf16.msra.mxu0 %v234
    %300 = vmatpush.bf16.msra.mxu0 %v233
    %301 = vmatmul.bf16.gmra.mxu0 %v246
    %v302 = vpop.f32.mrf.mxu0
    %v303 = vadd.f32 %v242, %v302
    %v304 = vpop.f32.mrf.mxu0
    %v305 = vadd.f32 %v242, %v304
    %306 = vmatmul.bf16.gmra.mxu0 %v249
    %v307 = vpop.f32.mrf.mxu0
    %v308 = vadd.f32 %v242, %v307
    %v309 = vpop.f32.mrf.mxu0
    %v310 = vadd.f32 %v242, %v309
    %311 = vmatmul.bf16.gmra.mxu0 %v252
    %v312 = vpop.f32.mrf.mxu0
    %v313 = vadd.f32 %v242, %v312
    %v314 = vpop.f32.mrf.mxu0
    %v315 = vadd.f32 %v242, %v314
    %316 = vmatmul.bf16.gmra.mxu0 %v255
    %v317 = vpop.f32.mrf.mxu0
    %v318 = vadd.f32 %v242, %v317
    %v319 = vpop.f32.mrf.mxu0
    %v320 = vadd.f32 %v242, %v319
    %321 = vmatmul.bf16.gmra.mxu0 %v258
    %v322 = vpop.f32.mrf.mxu0
    %v323 = vadd.f32 %v242, %v322
    %v324 = vpop.f32.mrf.mxu0
    %v325 = vadd.f32 %v242, %v324
    %326 = vmatmul.bf16.gmra.mxu0 %v261
    %v327 = vpop.f32.mrf.mxu0
    %v328 = vadd.f32 %v242, %v327
    %v329 = vpop.f32.mrf.mxu0
    %v330 = vadd.f32 %v242, %v329
    %331 = vmatmul.bf16.gmra.mxu0 %v264
    %v332 = vpop.f32.mrf.mxu0
    %v333 = vadd.f32 %v242, %v332
    %v334 = vpop.f32.mrf.mxu0
    %v335 = vadd.f32 %v242, %v334
    %336 = vmatmul.bf16.gmra.mxu0 %v267
    %v337 = vpop.f32.mrf.mxu0
    %v338 = vadd.f32 %v242, %v337
    %v339 = vpop.f32.mrf.mxu0
    %v340 = vadd.f32 %v242, %v339
    %341 = vmatmul.bf16.gmra.mxu0 %v270
    %v342 = vpop.f32.mrf.mxu0
    %v343 = vadd.f32 %v242, %v342
    %v344 = vpop.f32.mrf.mxu0
    %v345 = vadd.f32 %v242, %v344
    %346 = vmatmul.bf16.gmra.mxu0 %v273
    %v347 = vpop.f32.mrf.mxu0
    %v348 = vadd.f32 %v242, %v347
    %v349 = vpop.f32.mrf.mxu0
    %v350 = vadd.f32 %v242, %v349
    %351 = vmatmul.bf16.gmra.mxu0 %v276
    %v352 = vpop.f32.mrf.mxu0
    %v353 = vadd.f32 %v242, %v352
    %v354 = vpop.f32.mrf.mxu0
    %v355 = vadd.f32 %v242, %v354
    %356 = vmatmul.bf16.gmra.mxu0 %v279
    %v357 = vpop.f32.mrf.mxu0
    %v358 = vadd.f32 %v242, %v357
    %v359 = vpop.f32.mrf.mxu0
    %v360 = vadd.f32 %v242, %v359
    %361 = vmatmul.bf16.gmra.mxu0 %v282
    %v362 = vpop.f32.mrf.mxu0
    %v363 = vadd.f32 %v242, %v362
    %v364 = vpop.f32.mrf.mxu0
    %v365 = vadd.f32 %v242, %v364
    %366 = vmatmul.bf16.gmra.mxu0 %v285
    %v367 = vpop.f32.mrf.mxu0
    %v368 = vadd.f32 %v242, %v367
    %v369 = vpop.f32.mrf.mxu0
    %v370 = vadd.f32 %v242, %v369
    %371 = vmatmul.bf16.gmra.mxu0 %v288
    %v372 = vpop.f32.mrf.mxu0
    %v373 = vadd.f32 %v242, %v372
    %v374 = vpop.f32.mrf.mxu0
    %v375 = vadd.f32 %v242, %v374
    %376 = vmatmul.bf16.gmra.mxu0 %v291
    %v377 = vpop.f32.mrf.mxu0
    %v378 = vadd.f32 %v242, %v377
    %v379 = vpop.f32.mrf.mxu0
    %v380 = vadd.f32 %v242, %v379
    %381 = vdwg.mxu0
    %v382 = vtanh.pop %v303
    %v383 = vtanh.pop %v305
    %v384 = vtanh.pop %v308
    %v385 = vtanh.pop %v310
    %v386 = vtanh.pop %v313
    %v387 = vtanh.pop %v315
    %v388 = vtanh.pop %v318
    %v389 = vtanh.pop %v320
    %v390 = vtanh.pop %v323
    %v391 = vtanh.pop %v325
    %v392 = vtanh.pop %v328
    %v393 = vtanh.pop %v330
    %v394 = vtanh.pop %v333
    %v395 = vtanh.pop %v335
    %v396 = vtanh.pop %v338
    %v397 = vtanh.pop %v340
    %v398 = vtanh.pop %v343
    %v399 = vtanh.pop %v345
    %v400 = vtanh.pop %v348
    %v401 = vtanh.pop %v350
    %v402 = vtanh.pop %v353
    %v403 = vtanh.pop %v355
    %v404 = vtanh.pop %v358
    %v405 = vtanh.pop %v360
    %v406 = vtanh.pop %v363
    %v407 = vtanh.pop %v365
    %v408 = vtanh.pop %v368
    %v409 = vtanh.pop %v370
    %v410 = vtanh.pop %v373
    %v411 = vtanh.pop %v375
    %v412 = vtanh.pop %v378
    %v413 = vtanh.pop %v380
    %v414 = vpack.c.bf16 %v383, %v382
    %v415 = vpack.c.bf16 %v385, %v384
    %v416 = vpack.c.bf16 %v387, %v386
    %v417 = vpack.c.bf16 %v389, %v388
    %v418 = vpack.c.bf16 %v391, %v390
    %v419 = vpack.c.bf16 %v393, %v392
    %v420 = vpack.c.bf16 %v395, %v394
    %v421 = vpack.c.bf16 %v397, %v396
    %v422 = vpack.c.bf16 %v399, %v398
    %v423 = vpack.c.bf16 %v401, %v400
    %v424 = vpack.c.bf16 %v403, %v402
    %v425 = vpack.c.bf16 %v405, %v404
    %v426 = vpack.c.bf16 %v407, %v406
    %v427 = vpack.c.bf16 %v409, %v408
    %v428 = vpack.c.bf16 %v411, %v410
    %v429 = vpack.c.bf16 %v413, %v412
    %v434 = vunpack.c.l.b16 %v123
    %v435 = vunpack.c.l.b16 %v124
    %v436 = vunpack.c.l.b16 %v125
    %v437 = vunpack.c.l.b16 %v126
    %v438 = vpack.c.b16 %v435, %v434
    %v439 = vpack.c.b16 %v437, %v436
    %442 = vrot.lane.b32.xlu0 %v136, 32
    %v443 = vpop.permute.xlu0 %442
    %vm445 = vcmask 261120
    %v447 = vsel %vm445, %v414, 0
    %v450 = vsel %vm445, %v415, 0
    %v453 = vsel %vm445, %v416, 0
    %v456 = vsel %vm445, %v417, 0
    %v459 = vsel %vm445, %v418, 0
    %v462 = vsel %vm445, %v419, 0
    %v465 = vsel %vm445, %v420, 0
    %v468 = vsel %vm445, %v421, 0
    %v471 = vsel %vm445, %v422, 0
    %v474 = vsel %vm445, %v423, 0
    %v477 = vsel %vm445, %v424, 0
    %v480 = vsel %vm445, %v425, 0
    %v483 = vsel %vm445, %v426, 0
    %v486 = vsel %vm445, %v427, 0
    %v489 = vsel %vm445, %v428, 0
    %v492 = vsel %vm445, %v429, 0
    %494 = vmatpush.bf16.msra.mxu0 0
    %495 = vmatpush.bf16.msra.mxu0 0
    %496 = vmatpush.bf16.msra.mxu0 0
    %497 = vmatpush.bf16.msra.mxu0 0
    %498 = vmatpush.bf16.msra.mxu0 0
    %499 = vmatpush.bf16.msra.mxu0 0
    %500 = vmatpush.bf16.msra.mxu0 %v439
    %501 = vmatpush.bf16.msra.mxu0 %v438
    %502 = vmatmul.bf16.gmra.mxu0 %v447
    %v503 = vpop.f32.mrf.mxu0
    %v504 = vadd.f32 %v443, %v503
    %v505 = vpop.f32.mrf.mxu0
    %v506 = vadd.f32 %v443, %v505
    %507 = vmatmul.bf16.gmra.mxu0 %v450
    %v508 = vpop.f32.mrf.mxu0
    %v509 = vadd.f32 %v443, %v508
    %v510 = vpop.f32.mrf.mxu0
    %v511 = vadd.f32 %v443, %v510
    %512 = vmatmul.bf16.gmra.mxu0 %v453
    %v513 = vpop.f32.mrf.mxu0
    %v514 = vadd.f32 %v443, %v513
    %v515 = vpop.f32.mrf.mxu0
    %v516 = vadd.f32 %v443, %v515
    %517 = vmatmul.bf16.gmra.mxu0 %v456
    %v518 = vpop.f32.mrf.mxu0
    %v519 = vadd.f32 %v443, %v518
    %v520 = vpop.f32.mrf.mxu0
    %v521 = vadd.f32 %v443, %v520
    %522 = vmatmul.bf16.gmra.mxu0 %v459
    %v523 = vpop.f32.mrf.mxu0
    %v524 = vadd.f32 %v443, %v523
    %v525 = vpop.f32.mrf.mxu0
    %v526 = vadd.f32 %v443, %v525
    %527 = vmatmul.bf16.gmra.mxu0 %v462
    %v528 = vpop.f32.mrf.mxu0
    %v529 = vadd.f32 %v443, %v528
    %v530 = vpop.f32.mrf.mxu0
    %v531 = vadd.f32 %v443, %v530
    %532 = vmatmul.bf16.gmra.mxu0 %v465
    %v533 = vpop.f32.mrf.mxu0
    %v534 = vadd.f32 %v443, %v533
    %v535 = vpop.f32.mrf.mxu0
    %v536 = vadd.f32 %v443, %v535
    %537 = vmatmul.bf16.gmra.mxu0 %v468
    %v538 = vpop.f32.mrf.mxu0
    %v539 = vadd.f32 %v443, %v538
    %v540 = vpop.f32.mrf.mxu0
    %v541 = vadd.f32 %v443, %v540
    %542 = vmatmul.bf16.gmra.mxu0 %v471
    %v543 = vpop.f32.mrf.mxu0
    %v544 = vadd.f32 %v443, %v543
    %v545 = vpop.f32.mrf.mxu0
    %v546 = vadd.f32 %v443, %v545
    %547 = vmatmul.bf16.gmra.mxu0 %v474
    %v548 = vpop.f32.mrf.mxu0
    %v549 = vadd.f32 %v443, %v548
    %v550 = vpop.f32.mrf.mxu0
    %v551 = vadd.f32 %v443, %v550
    %552 = vmatmul.bf16.gmra.mxu0 %v477
    %v553 = vpop.f32.mrf.mxu0
    %v554 = vadd.f32 %v443, %v553
    %v555 = vpop.f32.mrf.mxu0
    %v556 = vadd.f32 %v443, %v555
    %557 = vmatmul.bf16.gmra.mxu0 %v480
    %v558 = vpop.f32.mrf.mxu0
    %v559 = vadd.f32 %v443, %v558
    %v560 = vpop.f32.mrf.mxu0
    %v561 = vadd.f32 %v443, %v560
    %562 = vmatmul.bf16.gmra.mxu0 %v483
    %v563 = vpop.f32.mrf.mxu0
    %v564 = vadd.f32 %v443, %v563
    %v565 = vpop.f32.mrf.mxu0
    %v566 = vadd.f32 %v443, %v565
    %567 = vmatmul.bf16.gmra.mxu0 %v486
    %v568 = vpop.f32.mrf.mxu0
    %v569 = vadd.f32 %v443, %v568
    %v570 = vpop.f32.mrf.mxu0
    %v571 = vadd.f32 %v443, %v570
    %572 = vmatmul.bf16.gmra.mxu0 %v489
    %v573 = vpop.f32.mrf.mxu0
    %v574 = vadd.f32 %v443, %v573
    %v575 = vpop.f32.mrf.mxu0
    %v576 = vadd.f32 %v443, %v575
    %577 = vmatmul.bf16.gmra.mxu0 %v492
    %v578 = vpop.f32.mrf.mxu0
    %v579 = vadd.f32 %v443, %v578
    %v580 = vpop.f32.mrf.mxu0
    %v581 = vadd.f32 %v443, %v580
    %582 = vdwg.mxu0
    %v583 = vmul.f32 %v504, 1.442695
    %v584 = vpow.pop %v583
    %v585 = vmul.f32 %v506, 1.442695
    %v586 = vpow.pop %v585
    %v587 = vmul.f32 %v509, 1.442695
    %v588 = vpow.pop %v587
    %v589 = vmul.f32 %v511, 1.442695
    %v590 = vpow.pop %v589
    %v591 = vmul.f32 %v514, 1.442695
    %v592 = vpow.pop %v591
    %v593 = vmul.f32 %v516, 1.442695
    %v594 = vpow.pop %v593
    %v595 = vmul.f32 %v519, 1.442695
    %v596 = vpow.pop %v595
    %v597 = vmul.f32 %v521, 1.442695
    %v598 = vpow.pop %v597
    %v599 = vmul.f32 %v524, 1.442695
    %v600 = vpow.pop %v599
    %v601 = vmul.f32 %v526, 1.442695
    %v602 = vpow.pop %v601
    %v603 = vmul.f32 %v529, 1.442695
    %v604 = vpow.pop %v603
    %v605 = vmul.f32 %v531, 1.442695
    %v606 = vpow.pop %v605
    %v607 = vmul.f32 %v534, 1.442695
    %v608 = vpow.pop %v607
    %v609 = vmul.f32 %v536, 1.442695
    %v610 = vpow.pop %v609
    %v611 = vmul.f32 %v539, 1.442695
    %v612 = vpow.pop %v611
    %v613 = vmul.f32 %v541, 1.442695
    %v614 = vpow.pop %v613
    %v615 = vmul.f32 %v544, 1.442695
    %v616 = vpow.pop %v615
    %v617 = vmul.f32 %v546, 1.442695
    %v618 = vpow.pop %v617
    %v619 = vmul.f32 %v549, 1.442695
    %v620 = vpow.pop %v619
    %v621 = vmul.f32 %v551, 1.442695
    %v622 = vpow.pop %v621
    %v623 = vmul.f32 %v554, 1.442695
    %v624 = vpow.pop %v623
    %v625 = vmul.f32 %v556, 1.442695
    %v626 = vpow.pop %v625
    %v627 = vmul.f32 %v559, 1.442695
    %v628 = vpow.pop %v627
    %v629 = vmul.f32 %v561, 1.442695
    %v630 = vpow.pop %v629
    %v631 = vmul.f32 %v564, 1.442695
    %v632 = vpow.pop %v631
    %v633 = vmul.f32 %v566, 1.442695
    %v634 = vpow.pop %v633
    %v635 = vmul.f32 %v569, 1.442695
    %v636 = vpow.pop %v635
    %v637 = vmul.f32 %v571, 1.442695
    %v638 = vpow.pop %v637
    %v639 = vmul.f32 %v574, 1.442695
    %v640 = vpow.pop %v639
    %v641 = vmul.f32 %v576, 1.442695
    %v642 = vpow.pop %v641
    %v643 = vmul.f32 %v579, 1.442695
    %v644 = vpow.pop %v643
    %v645 = vmul.f32 %v581, 1.442695
    %v646 = vpow.pop %v645
    %v647 = vadd.f32 %v584, 1e-08
    %v648 = vadd.f32 %v586, 1e-08
    %v649 = vadd.f32 %v588, 1e-08
    %v650 = vadd.f32 %v590, 1e-08
    %v651 = vadd.f32 %v592, 1e-08
    %v652 = vadd.f32 %v594, 1e-08
    %v653 = vadd.f32 %v596, 1e-08
    %v654 = vadd.f32 %v598, 1e-08
    %v655 = vadd.f32 %v600, 1e-08
    %v656 = vadd.f32 %v602, 1e-08
    %v657 = vadd.f32 %v604, 1e-08
    %v658 = vadd.f32 %v606, 1e-08
    %v659 = vadd.f32 %v608, 1e-08
    %v660 = vadd.f32 %v610, 1e-08
    %v661 = vadd.f32 %v612, 1e-08
    %v662 = vadd.f32 %v614, 1e-08
    %v663 = vadd.f32 %v616, 1e-08
    %v664 = vadd.f32 %v618, 1e-08
    %v665 = vadd.f32 %v620, 1e-08
    %v666 = vadd.f32 %v622, 1e-08
    %v667 = vadd.f32 %v624, 1e-08
    %v668 = vadd.f32 %v626, 1e-08
    %v669 = vadd.f32 %v628, 1e-08
    %v670 = vadd.f32 %v630, 1e-08
    %v671 = vadd.f32 %v632, 1e-08
    %v672 = vadd.f32 %v634, 1e-08
    %v673 = vadd.f32 %v636, 1e-08
    %v674 = vadd.f32 %v638, 1e-08
    %v675 = vadd.f32 %v640, 1e-08
    %v676 = vadd.f32 %v642, 1e-08
    %v677 = vadd.f32 %v644, 1e-08
    %v678 = vadd.f32 %v646, 1e-08
    %v679 = vrsqrt.pop %v647
    %v680 = vmul.f32 %v679, %v647
    %v681 = vmul.f32 %v680, %v679
    %v682 = vmul.f32 0.5, %v681
    %v683 = vsub.f32 1.5, %v682
    %v684 = vmul.f32 %v679, %v683
    %v685 = vmul.f32 %v647, %v684
    %vm686 = vcmp.eq.f32.partialorder %v647, inf
    %v687 = vsel %vm686, %v647, %v685
    %vm688 = vcmp.eq.f32.partialorder %v647, 0.0
    %v689 = vand.u32 %v647, 2147483648
    %v690 = vsel %vm688, %v689, %v687
    %v691 = vrsqrt.pop %v648
    %v692 = vmul.f32 %v691, %v648
    %v693 = vmul.f32 %v692, %v691
    %v694 = vmul.f32 0.5, %v693
    %v695 = vsub.f32 1.5, %v694
    %v696 = vmul.f32 %v691, %v695
    %v697 = vmul.f32 %v648, %v696
    %vm698 = vcmp.eq.f32.partialorder %v648, inf
    %v699 = vsel %vm698, %v648, %v697
    %vm700 = vcmp.eq.f32.partialorder %v648, 0.0
    %v701 = vand.u32 %v648, 2147483648
    %v702 = vsel %vm700, %v701, %v699
    %v703 = vrsqrt.pop %v649
    %v704 = vmul.f32 %v703, %v649
    %v705 = vmul.f32 %v704, %v703
    %v706 = vmul.f32 0.5, %v705
    %v707 = vsub.f32 1.5, %v706
    %v708 = vmul.f32 %v703, %v707
    %v709 = vmul.f32 %v649, %v708
    %vm710 = vcmp.eq.f32.partialorder %v649, inf
    %v711 = vsel %vm710, %v649, %v709
    %vm712 = vcmp.eq.f32.partialorder %v649, 0.0
    %v713 = vand.u32 %v649, 2147483648
    %v714 = vsel %vm712, %v713, %v711
    %v715 = vrsqrt.pop %v650
    %v716 = vmul.f32 %v715, %v650
    %v717 = vmul.f32 %v716, %v715
    %v718 = vmul.f32 0.5, %v717
    %v719 = vsub.f32 1.5, %v718
    %v720 = vmul.f32 %v715, %v719
    %v721 = vmul.f32 %v650, %v720
    %vm722 = vcmp.eq.f32.partialorder %v650, inf
    %v723 = vsel %vm722, %v650, %v721
    %vm724 = vcmp.eq.f32.partialorder %v650, 0.0
    %v725 = vand.u32 %v650, 2147483648
    %v726 = vsel %vm724, %v725, %v723
    %v727 = vrsqrt.pop %v651
    %v728 = vmul.f32 %v727, %v651
    %v729 = vmul.f32 %v728, %v727
    %v730 = vmul.f32 0.5, %v729
    %v731 = vsub.f32 1.5, %v730
    %v732 = vmul.f32 %v727, %v731
    %v733 = vmul.f32 %v651, %v732
    %vm734 = vcmp.eq.f32.partialorder %v651, inf
    %v735 = vsel %vm734, %v651, %v733
    %vm736 = vcmp.eq.f32.partialorder %v651, 0.0
    %v737 = vand.u32 %v651, 2147483648
    %v738 = vsel %vm736, %v737, %v735
    %v739 = vrsqrt.pop %v652
    %v740 = vmul.f32 %v739, %v652
    %v741 = vmul.f32 %v740, %v739
    %v742 = vmul.f32 0.5, %v741
    %v743 = vsub.f32 1.5, %v742
    %v744 = vmul.f32 %v739, %v743
    %v745 = vmul.f32 %v652, %v744
    %vm746 = vcmp.eq.f32.partialorder %v652, inf
    %v747 = vsel %vm746, %v652, %v745
    %vm748 = vcmp.eq.f32.partialorder %v652, 0.0
    %v749 = vand.u32 %v652, 2147483648
    %v750 = vsel %vm748, %v749, %v747
    %v751 = vrsqrt.pop %v653
    %v752 = vmul.f32 %v751, %v653
    %v753 = vmul.f32 %v752, %v751
    %v754 = vmul.f32 0.5, %v753
    %v755 = vsub.f32 1.5, %v754
    %v756 = vmul.f32 %v751, %v755
    %v757 = vmul.f32 %v653, %v756
    %vm758 = vcmp.eq.f32.partialorder %v653, inf
    %v759 = vsel %vm758, %v653, %v757
    %vm760 = vcmp.eq.f32.partialorder %v653, 0.0
    %v761 = vand.u32 %v653, 2147483648
    %v762 = vsel %vm760, %v761, %v759
    %v763 = vrsqrt.pop %v654
    %v764 = vmul.f32 %v763, %v654
    %v765 = vmul.f32 %v764, %v763
    %v766 = vmul.f32 0.5, %v765
    %v767 = vsub.f32 1.5, %v766
    %v768 = vmul.f32 %v763, %v767
    %v769 = vmul.f32 %v654, %v768
    %vm770 = vcmp.eq.f32.partialorder %v654, inf
    %v771 = vsel %vm770, %v654, %v769
    %vm772 = vcmp.eq.f32.partialorder %v654, 0.0
    %v773 = vand.u32 %v654, 2147483648
    %v774 = vsel %vm772, %v773, %v771
    %v775 = vrsqrt.pop %v655
    %v776 = vmul.f32 %v775, %v655
    %v777 = vmul.f32 %v776, %v775
    %v778 = vmul.f32 0.5, %v777
    %v779 = vsub.f32 1.5, %v778
    %v780 = vmul.f32 %v775, %v779
    %v781 = vmul.f32 %v655, %v780
    %vm782 = vcmp.eq.f32.partialorder %v655, inf
    %v783 = vsel %vm782, %v655, %v781
    %vm784 = vcmp.eq.f32.partialorder %v655, 0.0
    %v785 = vand.u32 %v655, 2147483648
    %v786 = vsel %vm784, %v785, %v783
    %v787 = vrsqrt.pop %v656
    %v788 = vmul.f32 %v787, %v656
    %v789 = vmul.f32 %v788, %v787
    %v790 = vmul.f32 0.5, %v789
    %v791 = vsub.f32 1.5, %v790
    %v792 = vmul.f32 %v787, %v791
    %v793 = vmul.f32 %v656, %v792
    %vm794 = vcmp.eq.f32.partialorder %v656, inf
    %v795 = vsel %vm794, %v656, %v793
    %vm796 = vcmp.eq.f32.partialorder %v656, 0.0
    %v797 = vand.u32 %v656, 2147483648
    %v798 = vsel %vm796, %v797, %v795
    %v799 = vrsqrt.pop %v657
    %v800 = vmul.f32 %v799, %v657
    %v801 = vmul.f32 %v800, %v799
    %v802 = vmul.f32 0.5, %v801
    %v803 = vsub.f32 1.5, %v802
    %v804 = vmul.f32 %v799, %v803
    %v805 = vmul.f32 %v657, %v804
    %vm806 = vcmp.eq.f32.partialorder %v657, inf
    %v807 = vsel %vm806, %v657, %v805
    %vm808 = vcmp.eq.f32.partialorder %v657, 0.0
    %v809 = vand.u32 %v657, 2147483648
    %v810 = vsel %vm808, %v809, %v807
    %v811 = vrsqrt.pop %v658
    %v812 = vmul.f32 %v811, %v658
    %v813 = vmul.f32 %v812, %v811
    %v814 = vmul.f32 0.5, %v813
    %v815 = vsub.f32 1.5, %v814
    %v816 = vmul.f32 %v811, %v815
    %v817 = vmul.f32 %v658, %v816
    %vm818 = vcmp.eq.f32.partialorder %v658, inf
    %v819 = vsel %vm818, %v658, %v817
    %vm820 = vcmp.eq.f32.partialorder %v658, 0.0
    %v821 = vand.u32 %v658, 2147483648
    %v822 = vsel %vm820, %v821, %v819
    %v823 = vrsqrt.pop %v659
    %v824 = vmul.f32 %v823, %v659
    %v825 = vmul.f32 %v824, %v823
    %v826 = vmul.f32 0.5, %v825
    %v827 = vsub.f32 1.5, %v826
    %v828 = vmul.f32 %v823, %v827
    %v829 = vmul.f32 %v659, %v828
    %vm830 = vcmp.eq.f32.partialorder %v659, inf
    %v831 = vsel %vm830, %v659, %v829
    %vm832 = vcmp.eq.f32.partialorder %v659, 0.0
    %v833 = vand.u32 %v659, 2147483648
    %v834 = vsel %vm832, %v833, %v831
    %v835 = vrsqrt.pop %v660
    %v836 = vmul.f32 %v835, %v660
    %v837 = vmul.f32 %v836, %v835
    %v838 = vmul.f32 0.5, %v837
    %v839 = vsub.f32 1.5, %v838
    %v840 = vmul.f32 %v835, %v839
    %v841 = vmul.f32 %v660, %v840
    %vm842 = vcmp.eq.f32.partialorder %v660, inf
    %v843 = vsel %vm842, %v660, %v841
    %vm844 = vcmp.eq.f32.partialorder %v660, 0.0
    %v845 = vand.u32 %v660, 2147483648
    %v846 = vsel %vm844, %v845, %v843
    %v847 = vrsqrt.pop %v661
    %v848 = vmul.f32 %v847, %v661
    %v849 = vmul.f32 %v848, %v847
    %v850 = vmul.f32 0.5, %v849
    %v851 = vsub.f32 1.5, %v850
    %v852 = vmul.f32 %v847, %v851
    %v853 = vmul.f32 %v661, %v852
    %vm854 = vcmp.eq.f32.partialorder %v661, inf
    %v855 = vsel %vm854, %v661, %v853
    %vm856 = vcmp.eq.f32.partialorder %v661, 0.0
    %v857 = vand.u32 %v661, 2147483648
    %v858 = vsel %vm856, %v857, %v855
    %v859 = vrsqrt.pop %v662
    %v860 = vmul.f32 %v859, %v662
    %v861 = vmul.f32 %v860, %v859
    %v862 = vmul.f32 0.5, %v861
    %v863 = vsub.f32 1.5, %v862
    %v864 = vmul.f32 %v859, %v863
    %v865 = vmul.f32 %v662, %v864
    %vm866 = vcmp.eq.f32.partialorder %v662, inf
    %v867 = vsel %vm866, %v662, %v865
    %vm868 = vcmp.eq.f32.partialorder %v662, 0.0
    %v869 = vand.u32 %v662, 2147483648
    %v870 = vsel %vm868, %v869, %v867
    %v871 = vrsqrt.pop %v663
    %v872 = vmul.f32 %v871, %v663
    %v873 = vmul.f32 %v872, %v871
    %v874 = vmul.f32 0.5, %v873
    %v875 = vsub.f32 1.5, %v874
    %v876 = vmul.f32 %v871, %v875
    %v877 = vmul.f32 %v663, %v876
    %vm878 = vcmp.eq.f32.partialorder %v663, inf
    %v879 = vsel %vm878, %v663, %v877
    %vm880 = vcmp.eq.f32.partialorder %v663, 0.0
    %v881 = vand.u32 %v663, 2147483648
    %v882 = vsel %vm880, %v881, %v879
    %v883 = vrsqrt.pop %v664
    %v884 = vmul.f32 %v883, %v664
    %v885 = vmul.f32 %v884, %v883
    %v886 = vmul.f32 0.5, %v885
    %v887 = vsub.f32 1.5, %v886
    %v888 = vmul.f32 %v883, %v887
    %v889 = vmul.f32 %v664, %v888
    %vm890 = vcmp.eq.f32.partialorder %v664, inf
    %v891 = vsel %vm890, %v664, %v889
    %vm892 = vcmp.eq.f32.partialorder %v664, 0.0
    %v893 = vand.u32 %v664, 2147483648
    %v894 = vsel %vm892, %v893, %v891
    %v895 = vrsqrt.pop %v665
    %v896 = vmul.f32 %v895, %v665
    %v897 = vmul.f32 %v896, %v895
    %v898 = vmul.f32 0.5, %v897
    %v899 = vsub.f32 1.5, %v898
    %v900 = vmul.f32 %v895, %v899
    %v901 = vmul.f32 %v665, %v900
    %vm902 = vcmp.eq.f32.partialorder %v665, inf
    %v903 = vsel %vm902, %v665, %v901
    %vm904 = vcmp.eq.f32.partialorder %v665, 0.0
    %v905 = vand.u32 %v665, 2147483648
    %v906 = vsel %vm904, %v905, %v903
    %v907 = vrsqrt.pop %v666
    %v908 = vmul.f32 %v907, %v666
    %v909 = vmul.f32 %v908, %v907
    %v910 = vmul.f32 0.5, %v909
    %v911 = vsub.f32 1.5, %v910
    %v912 = vmul.f32 %v907, %v911
    %v913 = vmul.f32 %v666, %v912
    %vm914 = vcmp.eq.f32.partialorder %v666, inf
    %v915 = vsel %vm914, %v666, %v913
    %vm916 = vcmp.eq.f32.partialorder %v666, 0.0
    %v917 = vand.u32 %v666, 2147483648
    %v918 = vsel %vm916, %v917, %v915
    %v919 = vrsqrt.pop %v667
    %v920 = vmul.f32 %v919, %v667
    %v921 = vmul.f32 %v920, %v919
    %v922 = vmul.f32 0.5, %v921
    %v923 = vsub.f32 1.5, %v922
    %v924 = vmul.f32 %v919, %v923
    %v925 = vmul.f32 %v667, %v924
    %vm926 = vcmp.eq.f32.partialorder %v667, inf
    %v927 = vsel %vm926, %v667, %v925
    %vm928 = vcmp.eq.f32.partialorder %v667, 0.0
    %v929 = vand.u32 %v667, 2147483648
    %v930 = vsel %vm928, %v929, %v927
    %v931 = vrsqrt.pop %v668
    %v932 = vmul.f32 %v931, %v668
    %v933 = vmul.f32 %v932, %v931
    %v934 = vmul.f32 0.5, %v933
    %v935 = vsub.f32 1.5, %v934
    %v936 = vmul.f32 %v931, %v935
    %v937 = vmul.f32 %v668, %v936
    %vm938 = vcmp.eq.f32.partialorder %v668, inf
    %v939 = vsel %vm938, %v668, %v937
    %vm940 = vcmp.eq.f32.partialorder %v668, 0.0
    %v941 = vand.u32 %v668, 2147483648
    %v942 = vsel %vm940, %v941, %v939
    %v943 = vrsqrt.pop %v669
    %v944 = vmul.f32 %v943, %v669
    %v945 = vmul.f32 %v944, %v943
    %v946 = vmul.f32 0.5, %v945
    %v947 = vsub.f32 1.5, %v946
    %v948 = vmul.f32 %v943, %v947
    %v949 = vmul.f32 %v669, %v948
    %vm950 = vcmp.eq.f32.partialorder %v669, inf
    %v951 = vsel %vm950, %v669, %v949
    %vm952 = vcmp.eq.f32.partialorder %v669, 0.0
    %v953 = vand.u32 %v669, 2147483648
    %v954 = vsel %vm952, %v953, %v951
    %v955 = vrsqrt.pop %v670
    %v956 = vmul.f32 %v955, %v670
    %v957 = vmul.f32 %v956, %v955
    %v958 = vmul.f32 0.5, %v957
    %v959 = vsub.f32 1.5, %v958
    %v960 = vmul.f32 %v955, %v959
    %v961 = vmul.f32 %v670, %v960
    %vm962 = vcmp.eq.f32.partialorder %v670, inf
    %v963 = vsel %vm962, %v670, %v961
    %vm964 = vcmp.eq.f32.partialorder %v670, 0.0
    %v965 = vand.u32 %v670, 2147483648
    %v966 = vsel %vm964, %v965, %v963
    %v967 = vrsqrt.pop %v671
    %v968 = vmul.f32 %v967, %v671
    %v969 = vmul.f32 %v968, %v967
    %v970 = vmul.f32 0.5, %v969
    %v971 = vsub.f32 1.5, %v970
    %v972 = vmul.f32 %v967, %v971
    %v973 = vmul.f32 %v671, %v972
    %vm974 = vcmp.eq.f32.partialorder %v671, inf
    %v975 = vsel %vm974, %v671, %v973
    %vm976 = vcmp.eq.f32.partialorder %v671, 0.0
    %v977 = vand.u32 %v671, 2147483648
    %v978 = vsel %vm976, %v977, %v975
    %v979 = vrsqrt.pop %v672
    %v980 = vmul.f32 %v979, %v672
    %v981 = vmul.f32 %v980, %v979
    %v982 = vmul.f32 0.5, %v981
    %v983 = vsub.f32 1.5, %v982
    %v984 = vmul.f32 %v979, %v983
    %v985 = vmul.f32 %v672, %v984
    %vm986 = vcmp.eq.f32.partialorder %v672, inf
    %v987 = vsel %vm986, %v672, %v985
    %vm988 = vcmp.eq.f32.partialorder %v672, 0.0
    %v989 = vand.u32 %v672, 2147483648
    %v990 = vsel %vm988, %v989, %v987
    %v991 = vrsqrt.pop %v673
    %v992 = vmul.f32 %v991, %v673
    %v993 = vmul.f32 %v992, %v991
    %v994 = vmul.f32 0.5, %v993
    %v995 = vsub.f32 1.5, %v994
    %v996 = vmul.f32 %v991, %v995
    %v997 = vmul.f32 %v673, %v996
    %vm998 = vcmp.eq.f32.partialorder %v673, inf
    %v999 = vsel %vm998, %v673, %v997
    %vm1000 = vcmp.eq.f32.partialorder %v673, 0.0
    %v1001 = vand.u32 %v673, 2147483648
    %v1002 = vsel %vm1000, %v1001, %v999
    %v1003 = vrsqrt.pop %v674
    %v1004 = vmul.f32 %v1003, %v674
    %v1005 = vmul.f32 %v1004, %v1003
    %v1006 = vmul.f32 0.5, %v1005
    %v1007 = vsub.f32 1.5, %v1006
    %v1008 = vmul.f32 %v1003, %v1007
    %v1009 = vmul.f32 %v674, %v1008
    %vm1010 = vcmp.eq.f32.partialorder %v674, inf
    %v1011 = vsel %vm1010, %v674, %v1009
    %vm1012 = vcmp.eq.f32.partialorder %v674, 0.0
    %v1013 = vand.u32 %v674, 2147483648
    %v1014 = vsel %vm1012, %v1013, %v1011
    %v1015 = vrsqrt.pop %v675
    %v1016 = vmul.f32 %v1015, %v675
    %v1017 = vmul.f32 %v1016, %v1015
    %v1018 = vmul.f32 0.5, %v1017
    %v1019 = vsub.f32 1.5, %v1018
    %v1020 = vmul.f32 %v1015, %v1019
    %v1021 = vmul.f32 %v675, %v1020
    %vm1022 = vcmp.eq.f32.partialorder %v675, inf
    %v1023 = vsel %vm1022, %v675, %v1021
    %vm1024 = vcmp.eq.f32.partialorder %v675, 0.0
    %v1025 = vand.u32 %v675, 2147483648
    %v1026 = vsel %vm1024, %v1025, %v1023
    %v1027 = vrsqrt.pop %v676
    %v1028 = vmul.f32 %v1027, %v676
    %v1029 = vmul.f32 %v1028, %v1027
    %v1030 = vmul.f32 0.5, %v1029
    %v1031 = vsub.f32 1.5, %v1030
    %v1032 = vmul.f32 %v1027, %v1031
    %v1033 = vmul.f32 %v676, %v1032
    %vm1034 = vcmp.eq.f32.partialorder %v676, inf
    %v1035 = vsel %vm1034, %v676, %v1033
    %vm1036 = vcmp.eq.f32.partialorder %v676, 0.0
    %v1037 = vand.u32 %v676, 2147483648
    %v1038 = vsel %vm1036, %v1037, %v1035
    %v1039 = vrsqrt.pop %v677
    %v1040 = vmul.f32 %v1039, %v677
    %v1041 = vmul.f32 %v1040, %v1039
    %v1042 = vmul.f32 0.5, %v1041
    %v1043 = vsub.f32 1.5, %v1042
    %v1044 = vmul.f32 %v1039, %v1043
    %v1045 = vmul.f32 %v677, %v1044
    %vm1046 = vcmp.eq.f32.partialorder %v677, inf
    %v1047 = vsel %vm1046, %v677, %v1045
    %vm1048 = vcmp.eq.f32.partialorder %v677, 0.0
    %v1049 = vand.u32 %v677, 2147483648
    %v1050 = vsel %vm1048, %v1049, %v1047
    %v1051 = vrsqrt.pop %v678
    %v1052 = vmul.f32 %v1051, %v678
    %v1053 = vmul.f32 %v1052, %v1051
    %v1054 = vmul.f32 0.5, %v1053
    %v1055 = vsub.f32 1.5, %v1054
    %v1056 = vmul.f32 %v1051, %v1055
    %v1057 = vmul.f32 %v678, %v1056
    %vm1058 = vcmp.eq.f32.partialorder %v678, inf
    %v1059 = vsel %vm1058, %v678, %v1057
    %vm1060 = vcmp.eq.f32.partialorder %v678, 0.0
    %v1061 = vand.u32 %v678, 2147483648
    %v1062 = vsel %vm1060, %v1061, %v1059
    %1095 = vrot.lane.b32.xlu0 %v83, 16
    %v1096 = vpop.permute.xlu0 %1095
    %1097 = vrot.lane.b32.xlu0 %v84, 16
    %v1098 = vpop.permute.xlu0 %1097
    %1099 = vrot.lane.b32.xlu0 %v85, 16
    %v1100 = vpop.permute.xlu0 %1099
    %1101 = vrot.lane.b32.xlu0 %v86, 16
    %v1102 = vpop.permute.xlu0 %1101
    %1103 = vrot.lane.b32.xlu0 %v87, 16
    %v1104 = vpop.permute.xlu0 %1103
    %1105 = vrot.lane.b32.xlu0 %v88, 16
    %v1106 = vpop.permute.xlu0 %1105
    %1107 = vrot.lane.b32.xlu0 %v89, 16
    %v1108 = vpop.permute.xlu0 %1107
    %1109 = vrot.lane.b32.xlu0 %v90, 16
    %v1110 = vpop.permute.xlu0 %1109
    %1111 = vrot.lane.b32.xlu0 %v91, 16
    %v1112 = vpop.permute.xlu0 %1111
    %1113 = vrot.lane.b32.xlu0 %v92, 16
    %v1114 = vpop.permute.xlu0 %1113
    %1115 = vrot.lane.b32.xlu0 %v93, 16
    %v1116 = vpop.permute.xlu0 %1115
    %1117 = vrot.lane.b32.xlu0 %v94, 16
    %v1118 = vpop.permute.xlu0 %1117
    %1119 = vrot.lane.b32.xlu0 %v95, 16
    %v1120 = vpop.permute.xlu0 %1119
    %1121 = vrot.lane.b32.xlu0 %v96, 16
    %v1122 = vpop.permute.xlu0 %1121
    %1123 = vrot.lane.b32.xlu0 %v97, 16
    %v1124 = vpop.permute.xlu0 %1123
    %1125 = vrot.lane.b32.xlu0 %v98, 16
    %v1126 = vpop.permute.xlu0 %1125
    %1127 = vrot.lane.b32.xlu0 %v99, 16
    %v1128 = vpop.permute.xlu0 %1127
    %1129 = vrot.lane.b32.xlu0 %v100, 16
    %v1130 = vpop.permute.xlu0 %1129
    %1131 = vrot.lane.b32.xlu0 %v101, 16
    %v1132 = vpop.permute.xlu0 %1131
    %1133 = vrot.lane.b32.xlu0 %v102, 16
    %v1134 = vpop.permute.xlu0 %1133
    %1135 = vrot.lane.b32.xlu0 %v103, 16
    %v1136 = vpop.permute.xlu0 %1135
    %1137 = vrot.lane.b32.xlu0 %v104, 16
    %v1138 = vpop.permute.xlu0 %1137
    %1139 = vrot.lane.b32.xlu0 %v105, 16
    %v1140 = vpop.permute.xlu0 %1139
    %1141 = vrot.lane.b32.xlu0 %v106, 16
    %v1142 = vpop.permute.xlu0 %1141
    %1143 = vrot.lane.b32.xlu0 %v107, 16
    %v1144 = vpop.permute.xlu0 %1143
    %1145 = vrot.lane.b32.xlu0 %v108, 16
    %v1146 = vpop.permute.xlu0 %1145
    %1147 = vrot.lane.b32.xlu0 %v109, 16
    %v1148 = vpop.permute.xlu0 %1147
    %1149 = vrot.lane.b32.xlu0 %v110, 16
    %v1150 = vpop.permute.xlu0 %1149
    %1151 = vrot.lane.b32.xlu0 %v111, 16
    %v1152 = vpop.permute.xlu0 %1151
    %1153 = vrot.lane.b32.xlu0 %v112, 16
    %v1154 = vpop.permute.xlu0 %1153
    %1155 = vrot.lane.b32.xlu0 %v113, 16
    %v1156 = vpop.permute.xlu0 %1155
    %1157 = vrot.lane.b32.xlu0 %v114, 16
    %v1158 = vpop.permute.xlu0 %1157
    %v1191 = vmul.f32 %v690, %v1096
    %v1192 = vmul.f32 %v702, %v1098
    %v1193 = vmul.f32 %v714, %v1100
    %v1194 = vmul.f32 %v726, %v1102
    %v1195 = vmul.f32 %v738, %v1104
    %v1196 = vmul.f32 %v750, %v1106
    %v1197 = vmul.f32 %v762, %v1108
    %v1198 = vmul.f32 %v774, %v1110
    %v1199 = vmul.f32 %v786, %v1112
    %v1200 = vmul.f32 %v798, %v1114
    %v1201 = vmul.f32 %v810, %v1116
    %v1202 = vmul.f32 %v822, %v1118
    %v1203 = vmul.f32 %v834, %v1120
    %v1204 = vmul.f32 %v846, %v1122
    %v1205 = vmul.f32 %v858, %v1124
    %v1206 = vmul.f32 %v870, %v1126
    %v1207 = vmul.f32 %v882, %v1128
    %v1208 = vmul.f32 %v894, %v1130
    %v1209 = vmul.f32 %v906, %v1132
    %v1210 = vmul.f32 %v918, %v1134
    %v1211 = vmul.f32 %v930, %v1136
    %v1212 = vmul.f32 %v942, %v1138
    %v1213 = vmul.f32 %v954, %v1140
    %v1214 = vmul.f32 %v966, %v1142
    %v1215 = vmul.f32 %v978, %v1144
    %v1216 = vmul.f32 %v990, %v1146
    %v1217 = vmul.f32 %v1002, %v1148
    %v1218 = vmul.f32 %v1014, %v1150
    %v1219 = vmul.f32 %v1026, %v1152
    %v1220 = vmul.f32 %v1038, %v1154
    %v1221 = vmul.f32 %v1050, %v1156
    %v1222 = vmul.f32 %v1062, %v1158
    %1255 = vrot.lane.b32.xlu0 %v1191, 112
    %v1256 = vpop.permute.xlu0 %1255
    %1257 = vrot.lane.b32.xlu0 %v1192, 112
    %v1258 = vpop.permute.xlu0 %1257
    %1259 = vrot.lane.b32.xlu0 %v1193, 112
    %v1260 = vpop.permute.xlu0 %1259
    %1261 = vrot.lane.b32.xlu0 %v1194, 112
    %v1262 = vpop.permute.xlu0 %1261
    %1263 = vrot.lane.b32.xlu0 %v1195, 112
    %v1264 = vpop.permute.xlu0 %1263
    %1265 = vrot.lane.b32.xlu0 %v1196, 112
    %v1266 = vpop.permute.xlu0 %1265
    %1267 = vrot.lane.b32.xlu0 %v1197, 112
    %v1268 = vpop.permute.xlu0 %1267
    %1269 = vrot.lane.b32.xlu0 %v1198, 112
    %v1270 = vpop.permute.xlu0 %1269
    %1271 = vrot.lane.b32.xlu0 %v1199, 112
    %v1272 = vpop.permute.xlu0 %1271
    %1273 = vrot.lane.b32.xlu0 %v1200, 112
    %v1274 = vpop.permute.xlu0 %1273
    %1275 = vrot.lane.b32.xlu0 %v1201, 112
    %v1276 = vpop.permute.xlu0 %1275
    %1277 = vrot.lane.b32.xlu0 %v1202, 112
    %v1278 = vpop.permute.xlu0 %1277
    %1279 = vrot.lane.b32.xlu0 %v1203, 112
    %v1280 = vpop.permute.xlu0 %1279
    %1281 = vrot.lane.b32.xlu0 %v1204, 112
    %v1282 = vpop.permute.xlu0 %1281
    %1283 = vrot.lane.b32.xlu0 %v1205, 112
    %v1284 = vpop.permute.xlu0 %1283
    %1285 = vrot.lane.b32.xlu0 %v1206, 112
    %v1286 = vpop.permute.xlu0 %1285
    %1287 = vrot.lane.b32.xlu0 %v1207, 112
    %v1288 = vpop.permute.xlu0 %1287
    %1289 = vrot.lane.b32.xlu0 %v1208, 112
    %v1290 = vpop.permute.xlu0 %1289
    %1291 = vrot.lane.b32.xlu0 %v1209, 112
    %v1292 = vpop.permute.xlu0 %1291
    %1293 = vrot.lane.b32.xlu0 %v1210, 112
    %v1294 = vpop.permute.xlu0 %1293
    %1295 = vrot.lane.b32.xlu0 %v1211, 112
    %v1296 = vpop.permute.xlu0 %1295
    %1297 = vrot.lane.b32.xlu0 %v1212, 112
    %v1298 = vpop.permute.xlu0 %1297
    %1299 = vrot.lane.b32.xlu0 %v1213, 112
    %v1300 = vpop.permute.xlu0 %1299
    %1301 = vrot.lane.b32.xlu0 %v1214, 112
    %v1302 = vpop.permute.xlu0 %1301
    %1303 = vrot.lane.b32.xlu0 %v1215, 112
    %v1304 = vpop.permute.xlu0 %1303
    %1305 = vrot.lane.b32.xlu0 %v1216, 112
    %v1306 = vpop.permute.xlu0 %1305
    %1307 = vrot.lane.b32.xlu0 %v1217, 112
    %v1308 = vpop.permute.xlu0 %1307
    %1309 = vrot.lane.b32.xlu0 %v1218, 112
    %v1310 = vpop.permute.xlu0 %1309
    %1311 = vrot.lane.b32.xlu0 %v1219, 112
    %v1312 = vpop.permute.xlu0 %1311
    %1313 = vrot.lane.b32.xlu0 %v1220, 112
    %v1314 = vpop.permute.xlu0 %1313
    %1315 = vrot.lane.b32.xlu0 %v1221, 112
    %v1316 = vpop.permute.xlu0 %1315
    %1317 = vrot.lane.b32.xlu0 %v1222, 112
    %v1318 = vpop.permute.xlu0 %1317
    %v1351 = vadd.f32 %v504, %v1256
    %v1352 = vadd.f32 %v506, %v1258
    %v1353 = vadd.f32 %v509, %v1260
    %v1354 = vadd.f32 %v511, %v1262
    %v1355 = vadd.f32 %v514, %v1264
    %v1356 = vadd.f32 %v516, %v1266
    %v1357 = vadd.f32 %v519, %v1268
    %v1358 = vadd.f32 %v521, %v1270
    %v1359 = vadd.f32 %v524, %v1272
    %v1360 = vadd.f32 %v526, %v1274
    %v1361 = vadd.f32 %v529, %v1276
    %v1362 = vadd.f32 %v531, %v1278
    %v1363 = vadd.f32 %v534, %v1280
    %v1364 = vadd.f32 %v536, %v1282
    %v1365 = vadd.f32 %v539, %v1284
    %v1366 = vadd.f32 %v541, %v1286
    %v1367 = vadd.f32 %v544, %v1288
    %v1368 = vadd.f32 %v546, %v1290
    %v1369 = vadd.f32 %v549, %v1292
    %v1370 = vadd.f32 %v551, %v1294
    %v1371 = vadd.f32 %v554, %v1296
    %v1372 = vadd.f32 %v556, %v1298
    %v1373 = vadd.f32 %v559, %v1300
    %v1374 = vadd.f32 %v561, %v1302
    %v1375 = vadd.f32 %v564, %v1304
    %v1376 = vadd.f32 %v566, %v1306
    %v1377 = vadd.f32 %v569, %v1308
    %v1378 = vadd.f32 %v571, %v1310
    %v1379 = vadd.f32 %v574, %v1312
    %v1380 = vadd.f32 %v576, %v1314
    %v1381 = vadd.f32 %v579, %v1316
    %v1382 = vadd.f32 %v581, %v1318
    %v1383 = vpack.c.bf16 %v1352, %v1351
    %v1384 = vpack.c.bf16 %v1354, %v1353
    %v1385 = vpack.c.bf16 %v1356, %v1355
    %v1386 = vpack.c.bf16 %v1358, %v1357
    %v1387 = vpack.c.bf16 %v1360, %v1359
    %v1388 = vpack.c.bf16 %v1362, %v1361
    %v1389 = vpack.c.bf16 %v1364, %v1363
    %v1390 = vpack.c.bf16 %v1366, %v1365
    %v1391 = vpack.c.bf16 %v1368, %v1367
    %v1392 = vpack.c.bf16 %v1370, %v1369
    %v1393 = vpack.c.bf16 %v1372, %v1371
    %v1394 = vpack.c.bf16 %v1374, %v1373
    %v1395 = vpack.c.bf16 %v1376, %v1375
    %v1396 = vpack.c.bf16 %v1378, %v1377
    %v1397 = vpack.c.bf16 %v1380, %v1379
    %v1398 = vpack.c.bf16 %v1382, %v1381
    %v1400 = vperm.slane %v134, 0
    %v1404 = vunpack.c.l.b16 %v127
    %v1405 = vunpack.c.l.b16 %v128
    %v1406 = vpack.c.b16 %v1405, %v1404
    %vm1408 = vcmask 130048
    %v1410 = vsel %vm1408, %v1383, 0
    %v1413 = vsel %vm1408, %v1384, 0
    %v1416 = vsel %vm1408, %v1385, 0
    %v1419 = vsel %vm1408, %v1386, 0
    %v1422 = vsel %vm1408, %v1387, 0
    %v1425 = vsel %vm1408, %v1388, 0
    %v1428 = vsel %vm1408, %v1389, 0
    %v1431 = vsel %vm1408, %v1390, 0
    %v1434 = vsel %vm1408, %v1391, 0
    %v1437 = vsel %vm1408, %v1392, 0
    %v1440 = vsel %vm1408, %v1393, 0
    %v1443 = vsel %vm1408, %v1394, 0
    %v1446 = vsel %vm1408, %v1395, 0
    %v1449 = vsel %vm1408, %v1396, 0
    %v1452 = vsel %vm1408, %v1397, 0
    %v1455 = vsel %vm1408, %v1398, 0
    %1457 = vmatpush.bf16.msra.mxu0 0
    %1458 = vmatpush.bf16.msra.mxu0 0
    %1459 = vmatpush.bf16.msra.mxu0 0
    %1460 = vmatpush.bf16.msra.mxu0 0
    %1461 = vmatpush.bf16.msra.mxu0 0
    %1462 = vmatpush.bf16.msra.mxu0 0
    %1463 = vmatpush.bf16.msra.mxu0 0
    %1464 = vmatpush.bf16.msra.mxu0 %v1406
    %1465 = vmatmul.bf16.gmra.mxu0 %v1410
    %v1466 = vpop.f32.mrf.mxu0
    %v1467 = vadd.f32 %v1400, %v1466
    %v1468 = vpop.f32.mrf.mxu0
    %v1469 = vadd.f32 %v1400, %v1468
    %1470 = vmatmul.bf16.gmra.mxu0 %v1413
    %v1471 = vpop.f32.mrf.mxu0
    %v1472 = vadd.f32 %v1400, %v1471
    %v1473 = vpop.f32.mrf.mxu0
    %v1474 = vadd.f32 %v1400, %v1473
    %1475 = vmatmul.bf16.gmra.mxu0 %v1416
    %v1476 = vpop.f32.mrf.mxu0
    %v1477 = vadd.f32 %v1400, %v1476
    %v1478 = vpop.f32.mrf.mxu0
    %v1479 = vadd.f32 %v1400, %v1478
    %1480 = vmatmul.bf16.gmra.mxu0 %v1419
    %v1481 = vpop.f32.mrf.mxu0
    %v1482 = vadd.f32 %v1400, %v1481
    %v1483 = vpop.f32.mrf.mxu0
    %v1484 = vadd.f32 %v1400, %v1483
    %1485 = vmatmul.bf16.gmra.mxu0 %v1422
    %v1486 = vpop.f32.mrf.mxu0
    %v1487 = vadd.f32 %v1400, %v1486
    %v1488 = vpop.f32.mrf.mxu0
    %v1489 = vadd.f32 %v1400, %v1488
    %1490 = vmatmul.bf16.gmra.mxu0 %v1425
    %v1491 = vpop.f32.mrf.mxu0
    %v1492 = vadd.f32 %v1400, %v1491
    %v1493 = vpop.f32.mrf.mxu0
    %v1494 = vadd.f32 %v1400, %v1493
    %1495 = vmatmul.bf16.gmra.mxu0 %v1428
    %v1496 = vpop.f32.mrf.mxu0
    %v1497 = vadd.f32 %v1400, %v1496
    %v1498 = vpop.f32.mrf.mxu0
    %v1499 = vadd.f32 %v1400, %v1498
    %1500 = vmatmul.bf16.gmra.mxu0 %v1431
    %v1501 = vpop.f32.mrf.mxu0
    %v1502 = vadd.f32 %v1400, %v1501
    %v1503 = vpop.f32.mrf.mxu0
    %v1504 = vadd.f32 %v1400, %v1503
    %1505 = vmatmul.bf16.gmra.mxu0 %v1434
    %v1506 = vpop.f32.mrf.mxu0
    %v1507 = vadd.f32 %v1400, %v1506
    %v1508 = vpop.f32.mrf.mxu0
    %v1509 = vadd.f32 %v1400, %v1508
    %1510 = vmatmul.bf16.gmra.mxu0 %v1437
    %v1511 = vpop.f32.mrf.mxu0
    %v1512 = vadd.f32 %v1400, %v1511
    %v1513 = vpop.f32.mrf.mxu0
    %v1514 = vadd.f32 %v1400, %v1513
    %1515 = vmatmul.bf16.gmra.mxu0 %v1440
    %v1516 = vpop.f32.mrf.mxu0
    %v1517 = vadd.f32 %v1400, %v1516
    %v1518 = vpop.f32.mrf.mxu0
    %v1519 = vadd.f32 %v1400, %v1518
    %1520 = vmatmul.bf16.gmra.mxu0 %v1443
    %v1521 = vpop.f32.mrf.mxu0
    %v1522 = vadd.f32 %v1400, %v1521
    %v1523 = vpop.f32.mrf.mxu0
    %v1524 = vadd.f32 %v1400, %v1523
    %1525 = vmatmul.bf16.gmra.mxu0 %v1446
    %v1526 = vpop.f32.mrf.mxu0
    %v1527 = vadd.f32 %v1400, %v1526
    %v1528 = vpop.f32.mrf.mxu0
    %v1529 = vadd.f32 %v1400, %v1528
    %1530 = vmatmul.bf16.gmra.mxu0 %v1449
    %v1531 = vpop.f32.mrf.mxu0
    %v1532 = vadd.f32 %v1400, %v1531
    %v1533 = vpop.f32.mrf.mxu0
    %v1534 = vadd.f32 %v1400, %v1533
    %1535 = vmatmul.bf16.gmra.mxu0 %v1452
    %v1536 = vpop.f32.mrf.mxu0
    %v1537 = vadd.f32 %v1400, %v1536
    %v1538 = vpop.f32.mrf.mxu0
    %v1539 = vadd.f32 %v1400, %v1538
    %1540 = vmatmul.bf16.gmra.mxu0 %v1455
    %v1541 = vpop.f32.mrf.mxu0
    %v1542 = vadd.f32 %v1400, %v1541
    %v1543 = vpop.f32.mrf.mxu0
    %v1544 = vadd.f32 %v1400, %v1543
    %1545 = vdwg.mxu0
    %v1546 = vtanh.pop %v1467
    %v1547 = vtanh.pop %v1469
    %v1548 = vtanh.pop %v1472
    %v1549 = vtanh.pop %v1474
    %v1550 = vtanh.pop %v1477
    %v1551 = vtanh.pop %v1479
    %v1552 = vtanh.pop %v1482
    %v1553 = vtanh.pop %v1484
    %v1554 = vtanh.pop %v1487
    %v1555 = vtanh.pop %v1489
    %v1556 = vtanh.pop %v1492
    %v1557 = vtanh.pop %v1494
    %v1558 = vtanh.pop %v1497
    %v1559 = vtanh.pop %v1499
    %v1560 = vtanh.pop %v1502
    %v1561 = vtanh.pop %v1504
    %v1562 = vtanh.pop %v1507
    %v1563 = vtanh.pop %v1509
    %v1564 = vtanh.pop %v1512
    %v1565 = vtanh.pop %v1514
    %v1566 = vtanh.pop %v1517
    %v1567 = vtanh.pop %v1519
    %v1568 = vtanh.pop %v1522
    %v1569 = vtanh.pop %v1524
    %v1570 = vtanh.pop %v1527
    %v1571 = vtanh.pop %v1529
    %v1572 = vtanh.pop %v1532
    %v1573 = vtanh.pop %v1534
    %v1574 = vtanh.pop %v1537
    %v1575 = vtanh.pop %v1539
    %v1576 = vtanh.pop %v1542
    %v1577 = vtanh.pop %v1544
    %v1578 = vpack.c.bf16 %v1547, %v1546
    %v1579 = vpack.c.bf16 %v1549, %v1548
    %v1580 = vpack.c.bf16 %v1551, %v1550
    %v1581 = vpack.c.bf16 %v1553, %v1552
    %v1582 = vpack.c.bf16 %v1555, %v1554
    %v1583 = vpack.c.bf16 %v1557, %v1556
    %v1584 = vpack.c.bf16 %v1559, %v1558
    %v1585 = vpack.c.bf16 %v1561, %v1560
    %v1586 = vpack.c.bf16 %v1563, %v1562
    %v1587 = vpack.c.bf16 %v1565, %v1564
    %v1588 = vpack.c.bf16 %v1567, %v1566
    %v1589 = vpack.c.bf16 %v1569, %v1568
    %v1590 = vpack.c.bf16 %v1571, %v1570
    %v1591 = vpack.c.bf16 %v1573, %v1572
    %v1592 = vpack.c.bf16 %v1575, %v1574
    %v1593 = vpack.c.bf16 %v1577, %v1576
    %v1599 = vunpack.c.l.b16 %v129
    %v1600 = vunpack.c.l.b16 %v130
    %v1601 = vunpack.c.l.b16 %v131
    %v1602 = vunpack.c.l.b16 %v132
    %v1603 = vpack.c.b16 %v1600, %v1599
    %v1604 = vpack.c.b16 %v1602, %v1601
    %v1608 = vsel %vm445, %v1578, 0
    %v1611 = vsel %vm445, %v1579, 0
    %v1614 = vsel %vm445, %v1580, 0
    %v1617 = vsel %vm445, %v1581, 0
    %v1620 = vsel %vm445, %v1582, 0
    %v1623 = vsel %vm445, %v1583, 0
    %v1626 = vsel %vm445, %v1584, 0
    %v1629 = vsel %vm445, %v1585, 0
    %v1632 = vsel %vm445, %v1586, 0
    %v1635 = vsel %vm445, %v1587, 0
    %v1638 = vsel %vm445, %v1588, 0
    %v1641 = vsel %vm445, %v1589, 0
    %v1644 = vsel %vm445, %v1590, 0
    %v1647 = vsel %vm445, %v1591, 0
    %v1650 = vsel %vm445, %v1592, 0
    %v1653 = vsel %vm445, %v1593, 0
    %1655 = vmatpush.bf16.msra.mxu0 0
    %1656 = vmatpush.bf16.msra.mxu0 0
    %1657 = vmatpush.bf16.msra.mxu0 0
    %1658 = vmatpush.bf16.msra.mxu0 0
    %1659 = vmatpush.bf16.msra.mxu0 0
    %1660 = vmatpush.bf16.msra.mxu0 0
    %1661 = vmatpush.bf16.msra.mxu0 %v1604
    %1662 = vmatpush.bf16.msra.mxu0 %v1603
    %1663 = vmatmul.bf16.gmra.mxu0 %v1608
    %v1664 = vpop.f32.mrf.mxu0
    %v1665 = vadd.f32 %v136, %v1664
    %v1666 = vpop.f32.mrf.mxu0
    %v1667 = vadd.f32 %v136, %v1666
    %1668 = vmatmul.bf16.gmra.mxu0 %v1611
    %v1669 = vpop.f32.mrf.mxu0
    %v1670 = vadd.f32 %v136, %v1669
    %v1671 = vpop.f32.mrf.mxu0
    %v1672 = vadd.f32 %v136, %v1671
    %1673 = vmatmul.bf16.gmra.mxu0 %v1614
    %v1674 = vpop.f32.mrf.mxu0
    %v1675 = vadd.f32 %v136, %v1674
    %v1676 = vpop.f32.mrf.mxu0
    %v1677 = vadd.f32 %v136, %v1676
    %1678 = vmatmul.bf16.gmra.mxu0 %v1617
    %v1679 = vpop.f32.mrf.mxu0
    %v1680 = vadd.f32 %v136, %v1679
    %v1681 = vpop.f32.mrf.mxu0
    %v1682 = vadd.f32 %v136, %v1681
    %1683 = vmatmul.bf16.gmra.mxu0 %v1620
    %v1684 = vpop.f32.mrf.mxu0
    %v1685 = vadd.f32 %v136, %v1684
    %v1686 = vpop.f32.mrf.mxu0
    %v1687 = vadd.f32 %v136, %v1686
    %1688 = vmatmul.bf16.gmra.mxu0 %v1623
    %v1689 = vpop.f32.mrf.mxu0
    %v1690 = vadd.f32 %v136, %v1689
    %v1691 = vpop.f32.mrf.mxu0
    %v1692 = vadd.f32 %v136, %v1691
    %1693 = vmatmul.bf16.gmra.mxu0 %v1626
    %v1694 = vpop.f32.mrf.mxu0
    %v1695 = vadd.f32 %v136, %v1694
    %v1696 = vpop.f32.mrf.mxu0
    %v1697 = vadd.f32 %v136, %v1696
    %1698 = vmatmul.bf16.gmra.mxu0 %v1629
    %v1699 = vpop.f32.mrf.mxu0
    %v1700 = vadd.f32 %v136, %v1699
    %v1701 = vpop.f32.mrf.mxu0
    %v1702 = vadd.f32 %v136, %v1701
    %1703 = vmatmul.bf16.gmra.mxu0 %v1632
    %v1704 = vpop.f32.mrf.mxu0
    %v1705 = vadd.f32 %v136, %v1704
    %v1706 = vpop.f32.mrf.mxu0
    %v1707 = vadd.f32 %v136, %v1706
    %1708 = vmatmul.bf16.gmra.mxu0 %v1635
    %v1709 = vpop.f32.mrf.mxu0
    %v1710 = vadd.f32 %v136, %v1709
    %v1711 = vpop.f32.mrf.mxu0
    %v1712 = vadd.f32 %v136, %v1711
    %1713 = vmatmul.bf16.gmra.mxu0 %v1638
    %v1714 = vpop.f32.mrf.mxu0
    %v1715 = vadd.f32 %v136, %v1714
    %v1716 = vpop.f32.mrf.mxu0
    %v1717 = vadd.f32 %v136, %v1716
    %1718 = vmatmul.bf16.gmra.mxu0 %v1641
    %v1719 = vpop.f32.mrf.mxu0
    %v1720 = vadd.f32 %v136, %v1719
    %v1721 = vpop.f32.mrf.mxu0
    %v1722 = vadd.f32 %v136, %v1721
    %1723 = vmatmul.bf16.gmra.mxu0 %v1644
    %v1724 = vpop.f32.mrf.mxu0
    %v1725 = vadd.f32 %v136, %v1724
    %v1726 = vpop.f32.mrf.mxu0
    %v1727 = vadd.f32 %v136, %v1726
    %1728 = vmatmul.bf16.gmra.mxu0 %v1647
    %v1729 = vpop.f32.mrf.mxu0
    %v1730 = vadd.f32 %v136, %v1729
    %v1731 = vpop.f32.mrf.mxu0
    %v1732 = vadd.f32 %v136, %v1731
    %1733 = vmatmul.bf16.gmra.mxu0 %v1650
    %v1734 = vpop.f32.mrf.mxu0
    %v1735 = vadd.f32 %v136, %v1734
    %v1736 = vpop.f32.mrf.mxu0
    %v1737 = vadd.f32 %v136, %v1736
    %1738 = vmatmul.bf16.gmra.mxu0 %v1653
    %v1739 = vpop.f32.mrf.mxu0
    %v1740 = vadd.f32 %v136, %v1739
    %v1741 = vpop.f32.mrf.mxu0
    %v1742 = vadd.f32 %v136, %v1741
    %1743 = vdwg.mxu0
    %1776 = vrot.lane.b32.xlu0 %v504, 64
    %v1777 = vpop.permute.xlu0 %1776
    %1778 = vrot.lane.b32.xlu0 %v506, 64
    %v1779 = vpop.permute.xlu0 %1778
    %1780 = vrot.lane.b32.xlu0 %v509, 64
    %v1781 = vpop.permute.xlu0 %1780
    %1782 = vrot.lane.b32.xlu0 %v511, 64
    %v1783 = vpop.permute.xlu0 %1782
    %1784 = vrot.lane.b32.xlu0 %v514, 64
    %v1785 = vpop.permute.xlu0 %1784
    %1786 = vrot.lane.b32.xlu0 %v516, 64
    %v1787 = vpop.permute.xlu0 %1786
    %1788 = vrot.lane.b32.xlu0 %v519, 64
    %v1789 = vpop.permute.xlu0 %1788
    %1790 = vrot.lane.b32.xlu0 %v521, 64
    %v1791 = vpop.permute.xlu0 %1790
    %1792 = vrot.lane.b32.xlu0 %v524, 64
    %v1793 = vpop.permute.xlu0 %1792
    %1794 = vrot.lane.b32.xlu0 %v526, 64
    %v1795 = vpop.permute.xlu0 %1794
    %1796 = vrot.lane.b32.xlu0 %v529, 64
    %v1797 = vpop.permute.xlu0 %1796
    %1798 = vrot.lane.b32.xlu0 %v531, 64
    %v1799 = vpop.permute.xlu0 %1798
    %1800 = vrot.lane.b32.xlu0 %v534, 64
    %v1801 = vpop.permute.xlu0 %1800
    %1802 = vrot.lane.b32.xlu0 %v536, 64
    %v1803 = vpop.permute.xlu0 %1802
    %1804 = vrot.lane.b32.xlu0 %v539, 64
    %v1805 = vpop.permute.xlu0 %1804
    %1806 = vrot.lane.b32.xlu0 %v541, 64
    %v1807 = vpop.permute.xlu0 %1806
    %1808 = vrot.lane.b32.xlu0 %v544, 64
    %v1809 = vpop.permute.xlu0 %1808
    %1810 = vrot.lane.b32.xlu0 %v546, 64
    %v1811 = vpop.permute.xlu0 %1810
    %1812 = vrot.lane.b32.xlu0 %v549, 64
    %v1813 = vpop.permute.xlu0 %1812
    %1814 = vrot.lane.b32.xlu0 %v551, 64
    %v1815 = vpop.permute.xlu0 %1814
    %1816 = vrot.lane.b32.xlu0 %v554, 64
    %v1817 = vpop.permute.xlu0 %1816
    %1818 = vrot.lane.b32.xlu0 %v556, 64
    %v1819 = vpop.permute.xlu0 %1818
    %1820 = vrot.lane.b32.xlu0 %v559, 64
    %v1821 = vpop.permute.xlu0 %1820
    %1822 = vrot.lane.b32.xlu0 %v561, 64
    %v1823 = vpop.permute.xlu0 %1822
    %1824 = vrot.lane.b32.xlu0 %v564, 64
    %v1825 = vpop.permute.xlu0 %1824
    %1826 = vrot.lane.b32.xlu0 %v566, 64
    %v1827 = vpop.permute.xlu0 %1826
    %1828 = vrot.lane.b32.xlu0 %v569, 64
    %v1829 = vpop.permute.xlu0 %1828
    %1830 = vrot.lane.b32.xlu0 %v571, 64
    %v1831 = vpop.permute.xlu0 %1830
    %1832 = vrot.lane.b32.xlu0 %v574, 64
    %v1833 = vpop.permute.xlu0 %1832
    %1834 = vrot.lane.b32.xlu0 %v576, 64
    %v1835 = vpop.permute.xlu0 %1834
    %1836 = vrot.lane.b32.xlu0 %v579, 64
    %v1837 = vpop.permute.xlu0 %1836
    %1838 = vrot.lane.b32.xlu0 %v581, 64
    %v1839 = vpop.permute.xlu0 %1838
    %1904 = vrot.lane.b32.xlu0 %v647, 64
    %v1905 = vpop.permute.xlu0 %1904
    %1906 = vrot.lane.b32.xlu0 %v648, 64
    %v1907 = vpop.permute.xlu0 %1906
    %1908 = vrot.lane.b32.xlu0 %v649, 64
    %v1909 = vpop.permute.xlu0 %1908
    %1910 = vrot.lane.b32.xlu0 %v650, 64
    %v1911 = vpop.permute.xlu0 %1910
    %1912 = vrot.lane.b32.xlu0 %v651, 64
    %v1913 = vpop.permute.xlu0 %1912
    %1914 = vrot.lane.b32.xlu0 %v652, 64
    %v1915 = vpop.permute.xlu0 %1914
    %1916 = vrot.lane.b32.xlu0 %v653, 64
    %v1917 = vpop.permute.xlu0 %1916
    %1918 = vrot.lane.b32.xlu0 %v654, 64
    %v1919 = vpop.permute.xlu0 %1918
    %1920 = vrot.lane.b32.xlu0 %v655, 64
    %v1921 = vpop.permute.xlu0 %1920
    %1922 = vrot.lane.b32.xlu0 %v656, 64
    %v1923 = vpop.permute.xlu0 %1922
    %1924 = vrot.lane.b32.xlu0 %v657, 64
    %v1925 = vpop.permute.xlu0 %1924
    %1926 = vrot.lane.b32.xlu0 %v658, 64
    %v1927 = vpop.permute.xlu0 %1926
    %1928 = vrot.lane.b32.xlu0 %v659, 64
    %v1929 = vpop.permute.xlu0 %1928
    %1930 = vrot.lane.b32.xlu0 %v660, 64
    %v1931 = vpop.permute.xlu0 %1930
    %1932 = vrot.lane.b32.xlu0 %v661, 64
    %v1933 = vpop.permute.xlu0 %1932
    %1934 = vrot.lane.b32.xlu0 %v662, 64
    %v1935 = vpop.permute.xlu0 %1934
    %1936 = vrot.lane.b32.xlu0 %v663, 64
    %v1937 = vpop.permute.xlu0 %1936
    %1938 = vrot.lane.b32.xlu0 %v664, 64
    %v1939 = vpop.permute.xlu0 %1938
    %1940 = vrot.lane.b32.xlu0 %v665, 64
    %v1941 = vpop.permute.xlu0 %1940
    %1942 = vrot.lane.b32.xlu0 %v666, 64
    %v1943 = vpop.permute.xlu0 %1942
    %1944 = vrot.lane.b32.xlu0 %v667, 64
    %v1945 = vpop.permute.xlu0 %1944
    %1946 = vrot.lane.b32.xlu0 %v668, 64
    %v1947 = vpop.permute.xlu0 %1946
    %1948 = vrot.lane.b32.xlu0 %v669, 64
    %v1949 = vpop.permute.xlu0 %1948
    %1950 = vrot.lane.b32.xlu0 %v670, 64
    %v1951 = vpop.permute.xlu0 %1950
    %1952 = vrot.lane.b32.xlu0 %v671, 64
    %v1953 = vpop.permute.xlu0 %1952
    %1954 = vrot.lane.b32.xlu0 %v672, 64
    %v1955 = vpop.permute.xlu0 %1954
    %1956 = vrot.lane.b32.xlu0 %v673, 64
    %v1957 = vpop.permute.xlu0 %1956
    %1958 = vrot.lane.b32.xlu0 %v674, 64
    %v1959 = vpop.permute.xlu0 %1958
    %1960 = vrot.lane.b32.xlu0 %v675, 64
    %v1961 = vpop.permute.xlu0 %1960
    %1962 = vrot.lane.b32.xlu0 %v676, 64
    %v1963 = vpop.permute.xlu0 %1962
    %1964 = vrot.lane.b32.xlu0 %v677, 64
    %v1965 = vpop.permute.xlu0 %1964
    %1966 = vrot.lane.b32.xlu0 %v678, 64
    %v1967 = vpop.permute.xlu0 %1966
    %v2000 = vsel %vm244, %v1665, %v1777
    %v2001 = vsel %vm244, %v1667, %v1779
    %v2002 = vsel %vm244, %v1670, %v1781
    %v2003 = vsel %vm244, %v1672, %v1783
    %v2004 = vsel %vm244, %v1675, %v1785
    %v2005 = vsel %vm244, %v1677, %v1787
    %v2006 = vsel %vm244, %v1680, %v1789
    %v2007 = vsel %vm244, %v1682, %v1791
    %v2008 = vsel %vm244, %v1685, %v1793
    %v2009 = vsel %vm244, %v1687, %v1795
    %v2010 = vsel %vm244, %v1690, %v1797
    %v2011 = vsel %vm244, %v1692, %v1799
    %v2012 = vsel %vm244, %v1695, %v1801
    %v2013 = vsel %vm244, %v1697, %v1803
    %v2014 = vsel %vm244, %v1700, %v1805
    %v2015 = vsel %vm244, %v1702, %v1807
    %v2016 = vsel %vm244, %v1705, %v1809
    %v2017 = vsel %vm244, %v1707, %v1811
    %v2018 = vsel %vm244, %v1710, %v1813
    %v2019 = vsel %vm244, %v1712, %v1815
    %v2020 = vsel %vm244, %v1715, %v1817
    %v2021 = vsel %vm244, %v1717, %v1819
    %v2022 = vsel %vm244, %v1720, %v1821
    %v2023 = vsel %vm244, %v1722, %v1823
    %v2024 = vsel %vm244, %v1725, %v1825
    %v2025 = vsel %vm244, %v1727, %v1827
    %v2026 = vsel %vm244, %v1730, %v1829
    %v2027 = vsel %vm244, %v1732, %v1831
    %v2028 = vsel %vm244, %v1735, %v1833
    %v2029 = vsel %vm244, %v1737, %v1835
    %v2030 = vsel %vm244, %v1740, %v1837
    %v2031 = vsel %vm244, %v1742, %v1839
    %vm2032 = vcmask 654336
    %v2033 = vsel %vm2032, %v2000, %v1905
    %v2034 = vsel %vm2032, %v2001, %v1907
    %v2035 = vsel %vm2032, %v2002, %v1909
    %v2036 = vsel %vm2032, %v2003, %v1911
    %v2037 = vsel %vm2032, %v2004, %v1913
    %v2038 = vsel %vm2032, %v2005, %v1915
    %v2039 = vsel %vm2032, %v2006, %v1917
    %v2040 = vsel %vm2032, %v2007, %v1919
    %v2041 = vsel %vm2032, %v2008, %v1921
    %v2042 = vsel %vm2032, %v2009, %v1923
    %v2043 = vsel %vm2032, %v2010, %v1925
    %v2044 = vsel %vm2032, %v2011, %v1927
    %v2045 = vsel %vm2032, %v2012, %v1929
    %v2046 = vsel %vm2032, %v2013, %v1931
    %v2047 = vsel %vm2032, %v2014, %v1933
    %v2048 = vsel %vm2032, %v2015, %v1935
    %v2049 = vsel %vm2032, %v2016, %v1937
    %v2050 = vsel %vm2032, %v2017, %v1939
    %v2051 = vsel %vm2032, %v2018, %v1941
    %v2052 = vsel %vm2032, %v2019, %v1943
    %v2053 = vsel %vm2032, %v2020, %v1945
    %v2054 = vsel %vm2032, %v2021, %v1947
    %v2055 = vsel %vm2032, %v2022, %v1949
    %v2056 = vsel %vm2032, %v2023, %v1951
    %v2057 = vsel %vm2032, %v2024, %v1953
    %v2058 = vsel %vm2032, %v2025, %v1955
    %v2059 = vsel %vm2032, %v2026, %v1957
    %v2060 = vsel %vm2032, %v2027, %v1959
    %v2061 = vsel %vm2032, %v2028, %v1961
    %v2062 = vsel %vm2032, %v2029, %v1963
    %v2063 = vsel %vm2032, %v2030, %v1965
    %v2064 = vsel %vm2032, %v2031, %v1967
    %vm2065 = vcmask 785408
    %v2066 = vsel %vm2065, %v2033, 0.0
    %v2067 = vsel %vm2065, %v2034, 0.0
    %v2068 = vsel %vm2065, %v2035, 0.0
    %v2069 = vsel %vm2065, %v2036, 0.0
    %v2070 = vsel %vm2065, %v2037, 0.0
    %v2071 = vsel %vm2065, %v2038, 0.0
    %v2072 = vsel %vm2065, %v2039, 0.0
    %v2073 = vsel %vm2065, %v2040, 0.0
    %v2074 = vsel %vm2065, %v2041, 0.0
    %v2075 = vsel %vm2065, %v2042, 0.0
    %v2076 = vsel %vm2065, %v2043, 0.0
    %v2077 = vsel %vm2065, %v2044, 0.0
    %v2078 = vsel %vm2065, %v2045, 0.0
    %v2079 = vsel %vm2065, %v2046, 0.0
    %v2080 = vsel %vm2065, %v2047, 0.0
    %v2081 = vsel %vm2065, %v2048, 0.0
    %v2082 = vsel %vm2065, %v2049, 0.0
    %v2083 = vsel %vm2065, %v2050, 0.0
    %v2084 = vsel %vm2065, %v2051, 0.0
    %v2085 = vsel %vm2065, %v2052, 0.0
    %v2086 = vsel %vm2065, %v2053, 0.0
    %v2087 = vsel %vm2065, %v2054, 0.0
    %v2088 = vsel %vm2065, %v2055, 0.0
    %v2089 = vsel %vm2065, %v2056, 0.0
    %v2090 = vsel %vm2065, %v2057, 0.0
    %v2091 = vsel %vm2065, %v2058, 0.0
    %v2092 = vsel %vm2065, %v2059, 0.0
    %v2093 = vsel %vm2065, %v2060, 0.0
    %v2094 = vsel %vm2065, %v2061, 0.0
    %v2095 = vsel %vm2065, %v2062, 0.0
    %v2096 = vsel %vm2065, %v2063, 0.0
    %v2097 = vsel %vm2065, %v2064, 0.0
    %v2098 = vpack.c.bf16 %v2066, %v2066
    %v2099 = vpack.c.bf16 %v2067, %v2067
    %v2100 = vpack.c.bf16 %v2068, %v2068
    %v2101 = vpack.c.bf16 %v2069, %v2069
    %v2102 = vpack.c.bf16 %v2070, %v2070
    %v2103 = vpack.c.bf16 %v2071, %v2071
    %v2104 = vpack.c.bf16 %v2072, %v2072
    %v2105 = vpack.c.bf16 %v2073, %v2073
    %v2106 = vpack.c.bf16 %v2074, %v2074
    %v2107 = vpack.c.bf16 %v2075, %v2075
    %v2108 = vpack.c.bf16 %v2076, %v2076
    %v2109 = vpack.c.bf16 %v2077, %v2077
    %v2110 = vpack.c.bf16 %v2078, %v2078
    %v2111 = vpack.c.bf16 %v2079, %v2079
    %v2112 = vpack.c.bf16 %v2080, %v2080
    %v2113 = vpack.c.bf16 %v2081, %v2081
    %v2114 = vpack.c.bf16 %v2082, %v2082
    %v2115 = vpack.c.bf16 %v2083, %v2083
    %v2116 = vpack.c.bf16 %v2084, %v2084
    %v2117 = vpack.c.bf16 %v2085, %v2085
    %v2118 = vpack.c.bf16 %v2086, %v2086
    %v2119 = vpack.c.bf16 %v2087, %v2087
    %v2120 = vpack.c.bf16 %v2088, %v2088
    %v2121 = vpack.c.bf16 %v2089, %v2089
    %v2122 = vpack.c.bf16 %v2090, %v2090
    %v2123 = vpack.c.bf16 %v2091, %v2091
    %v2124 = vpack.c.bf16 %v2092, %v2092
    %v2125 = vpack.c.bf16 %v2093, %v2093
    %v2126 = vpack.c.bf16 %v2094, %v2094
    %v2127 = vpack.c.bf16 %v2095, %v2095
    %v2128 = vpack.c.bf16 %v2096, %v2096
    %v2129 = vpack.c.bf16 %v2097, %v2097
    %2130 = vst [vmem:[#allocation2] sm:$0xf] %v2098
    %2131 = vst [vmem:[#allocation2 + $0x4] sm:$0xf] %v2099
    %2132 = vst [vmem:[#allocation2 + $0x8] sm:$0xf] %v2100
    %2133 = vst [vmem:[#allocation2 + $0xc] sm:$0xf] %v2101
    %2134 = vst [vmem:[#allocation2 + $0x10] sm:$0xf] %v2102
    %2135 = vst [vmem:[#allocation2 + $0x14] sm:$0xf] %v2103
    %2136 = vst [vmem:[#allocation2 + $0x18] sm:$0xf] %v2104
    %2137 = vst [vmem:[#allocation2 + $0x1c] sm:$0xf] %v2105
    %2138 = vst [vmem:[#allocation2 + $0x20] sm:$0xf] %v2106
    %2139 = vst [vmem:[#allocation2 + $0x24] sm:$0xf] %v2107
    %2140 = vst [vmem:[#allocation2 + $0x28] sm:$0xf] %v2108
    %2141 = vst [vmem:[#allocation2 + $0x2c] sm:$0xf] %v2109
    %2142 = vst [vmem:[#allocation2 + $0x30] sm:$0xf] %v2110
    %2143 = vst [vmem:[#allocation2 + $0x34] sm:$0xf] %v2111
    %2144 = vst [vmem:[#allocation2 + $0x38] sm:$0xf] %v2112
    %2145 = vst [vmem:[#allocation2 + $0x3c] sm:$0xf] %v2113
    %2146 = vst [vmem:[#allocation2 + $0x40] sm:$0xf] %v2114
    %2147 = vst [vmem:[#allocation2 + $0x44] sm:$0xf] %v2115
    %2148 = vst [vmem:[#allocation2 + $0x48] sm:$0xf] %v2116
    %2149 = vst [vmem:[#allocation2 + $0x4c] sm:$0xf] %v2117
    %2150 = vst [vmem:[#allocation2 + $0x50] sm:$0xf] %v2118
    %2151 = vst [vmem:[#allocation2 + $0x54] sm:$0xf] %v2119
    %2152 = vst [vmem:[#allocation2 + $0x58] sm:$0xf] %v2120
    %2153 = vst [vmem:[#allocation2 + $0x5c] sm:$0xf] %v2121
    %2154 = vst [vmem:[#allocation2 + $0x60] sm:$0xf] %v2122
    %2155 = vst [vmem:[#allocation2 + $0x64] sm:$0xf] %v2123
    %2156 = vst [vmem:[#allocation2 + $0x68] sm:$0xf] %v2124
    %2157 = vst [vmem:[#allocation2 + $0x6c] sm:$0xf] %v2125
    %2158 = vst [vmem:[#allocation2 + $0x70] sm:$0xf] %v2126
    %2159 = vst [vmem:[#allocation2 + $0x74] sm:$0xf] %v2127
    %2160 = vst [vmem:[#allocation2 + $0x78] sm:$0xf] %v2128
    %2161 = vst [vmem:[#allocation2 + $0x7c] sm:$0xf] %v2129
    // Predicated region
    $region18: #{tpu_custom_call.1} parent=1 // pred_check
      _
    $region19: #{tpu_custom_call.1} parent=1 // pred_check_branch
      %2163 = sbr.rel (0) target = $region21
    $region20: #{tpu_custom_call.1} parent=1 // pred_region
      %2165 = vsyncadd [#allocation3], 0
      %s2166 = sshll.u32 [#allocation2], 4
      %s2167 = int_to_ptr.vmem [resolvable:$true] %s2166
      %s2168 = sshll.u32 %s4, 4
      %s2169 = int_to_ptr.hbm [resolvable:$true] %s2168
      %2174 = dma.vmem_to_hbm [thread:$0]  %s2167, 2048, %s2169, [#allocation3], 64, 64, 4
    $region21: #{tpu_custom_call.1} parent=1 // pred_fallthru
      _
    // Predicated region
    $region22: #{tpu_custom_call.1} parent=1 // pred_check
      _
    $region23: #{tpu_custom_call.1} parent=1 // pred_check_branch
      %2176 = sbr.rel (0) target = $region25
    $region24: #{tpu_custom_call.1} parent=1 // pred_region
      %2178 = dma.done [#allocation3], 2048
    $region25: #{tpu_custom_call.1} parent=1 // pred_fallthru
      _
    %2179 = vsyncpa [#allocation3], 1

</llo_original>
